<compile_context>
chip_gen: v7x
topology: tpu7x:2x2x1
jax: 0.10.0
libtpu: 0.0.40
codegen_flags: <defaults>
</compile_context>

<pallas_src>
import jax
import jax.numpy as jnp
from jax import lax
from jax.experimental import pallas as pl
from jax.experimental.pallas import tpu as pltpu

# ---- model sizes (small, MXU/lane friendly; VOCAB=128 keeps decoder output lane-dense) ----
VOCAB = 128
EMDIM = 32
HIDIM = 32
NLAYERS = 1
BATCH = 8
SEQLEN = 8


# ---------------- fused Pallas kernel ----------------

def _fused_rnn_kernel(word_idx_ref, seq_idx_ref, emb_ref,
                      w2h_w_ref, w2h_b_ref, wih_ref, whh_ref, b_ref,
                      decw_ref, decb_ref,
                      dec_ref, hT_ref, cT_ref):
    B = word_idx_ref.shape[0]
    TB = seq_idx_ref.shape[0]
    T = TB // B
    H = hT_ref.shape[-1]
    V = emb_ref.shape[0]

    emb = emb_ref[...]                                                    # (V, E) f32

    # In-kernel embedding gathers as one-hot @ table (MXU-friendly, no gather op).
    lane_w = lax.broadcasted_iota(jnp.int32, (B, V), 1)
    word_oh = (word_idx_ref[...] == lane_w).astype(jnp.float32)           # (B, V)
    word_emb = jnp.dot(word_oh, emb, preferred_element_type=jnp.float32)  # (B, E)

    lane_s = lax.broadcasted_iota(jnp.int32, (TB, V), 1)
    seq_oh = (seq_idx_ref[...] == lane_s).astype(jnp.float32)             # (TB, V)
    seq_emb = jnp.dot(seq_oh, emb, preferred_element_type=jnp.float32)    # (TB, E)

    # init_hidden: c0 = word2hidden(word_emb), h0 = zeros  (bf16 MXU, f32 accumulate)
    c0 = (jnp.dot(word_emb.astype(jnp.bfloat16), w2h_w_ref[...],
                  preferred_element_type=jnp.float32) + w2h_b_ref[...])   # (B, H)
    h0 = jnp.zeros_like(c0)

    # Hoisted input projection for all timesteps, kept in vregs ((TB,4H) f32 = 8 vregs).
    gx = (jnp.dot(seq_emb.astype(jnp.bfloat16), wih_ref[...],
                  preferred_element_type=jnp.float32) + b_ref[...])       # (TB, 4H)

    w_hh = whh_ref[...]                                                   # (H, 4H) bf16
    dec_w = decw_ref[...]                                                 # (H, V)  bf16
    dec_b = decb_ref[...]                                                 # (1, V)  f32

    # lane mask selecting the 'g' gate lanes (tanh); everything else is sigmoid.
    lane = lax.broadcasted_iota(jnp.int32, (B, 4 * H), 1)
    g_mask = (lane >= 2 * H) & (lane < 3 * H)

    h, c = h0, c0
    for t in range(T):                    # fully unrolled, static sublane-aligned slices
        gates = gx[t * B:(t + 1) * B, :] + jnp.dot(
            h.astype(jnp.bfloat16), w_hh, preferred_element_type=jnp.float32)   # (B, 4H)
        # Single EUP push over the full (B,4H) vreg:
        #   sigmoid lanes as-is; g lanes via tanh(x) = 2*sigmoid(2x) - 1.
        s = jax.nn.sigmoid(jnp.where(g_mask, 2.0 * gates, gates))
        acts = jnp.where(g_mask, 2.0 * s - 1.0, s)
        i = acts[:, 0:H]
        f = acts[:, H:2 * H]
        g = acts[:, 2 * H:3 * H]
        o = acts[:, 3 * H:4 * H]
        c = f * c + i * g
        h = o * jnp.tanh(c)
        # Decoder fused into the step: lane-dense (B, V) store; hides under next step's
        # h@W_hh latency chain.
        dec_ref[t * B:(t + 1) * B, :] = (
            jnp.dot(h.astype(jnp.bfloat16), dec_w,
                    preferred_element_type=jnp.float32) + dec_b)

    # final hidden state written once
    hT_ref[...] = h
    cT_ref[...] = c


def fused_rnn_forward(word, seq, params):
    T, B = seq.shape
    assert B % 8 == 0, "batch must be a multiple of 8 (sublane alignment)"
    assert VOCAB % 128 == 0, "vocab must be a multiple of 128 (lane-dense decoder)"
    TB = T * B
    word_idx = word.astype(jnp.int32).reshape(B, 1)
    seq_idx = seq.astype(jnp.int32).reshape(TB, 1)       # time-major flatten

    return pl.pallas_call(
        _fused_rnn_kernel,
        out_shape=(jax.ShapeDtypeStruct((TB, VOCAB), jnp.float32),   # decoded
                   jax.ShapeDtypeStruct((B, HIDIM), jnp.float32),    # h_T
                   jax.ShapeDtypeStruct((B, HIDIM), jnp.float32)),   # c_T
    )(word_idx, seq_idx,
      params["embedding"],
      params["w2h_w"].astype(jnp.bfloat16),
      params["w2h_b"].reshape(1, HIDIM),
      params["w_ih"].astype(jnp.bfloat16),
      params["w_hh"].astype(jnp.bfloat16),
      params["b_lstm"].reshape(1, 4 * HIDIM),
      params["dec_w"].astype(jnp.bfloat16),
      params["dec_b"].reshape(1, VOCAB))


# ---------------- parameter init (deterministic, mirrors module __init__) ----------------

def xavier_normal(key, fan_out, fan_in, shape):
    std = jnp.sqrt(2.0 / (fan_in + fan_out))
    return std * jax.random.normal(key, shape, dtype=jnp.float32)


def init_params(key):
    ks = jax.random.split(key, 5)
    scale = jnp.sqrt(3.0 / EMDIM)
    params = {
        # random_embedding: uniform(-scale, scale)
        "embedding": jax.random.uniform(ks[0], (VOCAB, EMDIM), jnp.float32,
                                        minval=-scale, maxval=scale),
        # word2hidden: PyTorch weight (H, E) xavier-normal; stored transposed (E, H)
        "w2h_w": xavier_normal(ks[1], HIDIM, EMDIM, (EMDIM, HIDIM)),
        "w2h_b": jnp.zeros((HIDIM,), jnp.float32),
        # LSTM weight_ih_l0 (4H, E), weight_hh_l0 (4H, H) xavier-normal; stored transposed
        "w_ih": xavier_normal(ks[2], 4 * HIDIM, EMDIM, (EMDIM, 4 * HIDIM)),
        "w_hh": xavier_normal(ks[3], 4 * HIDIM, HIDIM, (HIDIM, 4 * HIDIM)),
        "b_lstm": jnp.zeros((4 * HIDIM,), jnp.float32),  # bias_ih + bias_hh, both zero
        # decoder: PyTorch weight (V, H); stored transposed (H, V)
        "dec_w": xavier_normal(ks[4], VOCAB, HIDIM, (HIDIM, VOCAB)),
        "dec_b": jnp.zeros((VOCAB,), jnp.float32),
    }
    return params


# ---------------- model forward (everything inside the fused kernel) ----------------

def rnn_model_forward(params, word, seq):
    # word: (B,) int32 ; seq: (T, B) int32  -- time-major, as in the PyTorch module
    # TODO(synk): embedded_dropout / LockedDropout / drop are identity in eval mode
    #             (training dropout omitted); conditioning branches (use_input/use_hidden/
    #             use_gated/use_ch/use_he), WeightDrop and tied weights not exercised.
    decoded, h_T, c_T = fused_rnn_forward(word, seq, params)
    hidden = (h_T[None, :, :], c_T[None, :, :])                     # (nlayers, B, H) each
    return decoded, hidden


# ---------------- pure-JAX f32 reference (for correctness check) ----------------

def reference_forward(params, word, seq):
    word_emb = jnp.take(params["embedding"], word, axis=0)
    seq_emb = jnp.take(params["embedding"], seq, axis=0)
    c0 = word_emb @ params["w2h_w"] + params["w2h_b"]
    h0 = jnp.zeros_like(c0)
    H = HIDIM

    def step(carry, x):
        h, c = carry
        gates = x @ params["w_ih"] + h @ params["w_hh"] + params["b_lstm"]
        i = jax.nn.sigmoid(gates[:, 0:H])
        f = jax.nn.sigmoid(gates[:, H:2 * H])
        g = jnp.tanh(gates[:, 2 * H:3 * H])
        o = jax.nn.sigmoid(gates[:, 3 * H:4 * H])
        c_new = f * c + i * g
        h_new = o * jnp.tanh(c_new)
        return (h_new, c_new), h_new

    (h_T, c_T), hs = jax.lax.scan(step, (h0, c0), seq_emb)
    outputs = hs.reshape(-1, HIDIM)
    decoded = outputs @ params["dec_w"] + params["dec_b"]
    return decoded, (h_T[None], c_T[None])


if __name__ == "__main__":
    key = jax.random.PRNGKey(0)
    kp, kw, ks = jax.random.split(key, 3)
    params = init_params(kp)

    word = jax.random.randint(kw, (BATCH,), 0, VOCAB, dtype=jnp.int32)
    seq = jax.random.randint(ks, (SEQLEN, BATCH), 0, VOCAB, dtype=jnp.int32)

    decoded, (h_T, c_T) = rnn_model_forward(params, word, seq)
    jax.block_until_ready((decoded, h_T, c_T))

    ref_decoded, (ref_h, ref_c) = reference_forward(params, word, seq)
    assert decoded.shape == (SEQLEN * BATCH, VOCAB)
    assert h_T.shape == (NLAYERS, BATCH, HIDIM) and c_T.shape == (NLAYERS, BATCH, HIDIM)
    # Kernel matmuls run in bf16 on the MXU (f32 accumulation); reference is pure f32,
    # so the tolerance is relaxed vs. an exact-f32 comparison.
    assert jnp.allclose(decoded, ref_decoded, atol=2e-2, rtol=2e-2)
    assert jnp.allclose(h_T, ref_h, atol=2e-2, rtol=2e-2)
    assert jnp.allclose(c_T, ref_c, atol=2e-2, rtol=2e-2)

    print("KERNEL_OK")
</pallas_src>

<mosaic_0001>
module attributes {stable_mosaic.version = 11 : i64} {
  func.func @_fused_rnn_kernel(%arg0: memref<8x1xi32, #tpu.memory_space<vmem>>, %arg1: memref<64x1xi32, #tpu.memory_space<vmem>>, %arg2: memref<128x32xf32, #tpu.memory_space<vmem>>, %arg3: memref<32x32xbf16, #tpu.memory_space<vmem>>, %arg4: memref<1x32xf32, #tpu.memory_space<vmem>>, %arg5: memref<32x128xbf16, #tpu.memory_space<vmem>>, %arg6: memref<32x128xbf16, #tpu.memory_space<vmem>>, %arg7: memref<1x128xf32, #tpu.memory_space<vmem>>, %arg8: memref<32x128xbf16, #tpu.memory_space<vmem>>, %arg9: memref<1x128xf32, #tpu.memory_space<vmem>>, %arg10: memref<64x128xf32, #tpu.memory_space<vmem>>, %arg11: memref<8x32xf32, #tpu.memory_space<vmem>>, %arg12: memref<8x32xf32, #tpu.memory_space<vmem>>) attributes {dimension_semantics = [], scalar_prefetch = 0 : i64, scratch_operands = 0 : i64, tpu.core_type = #tpu.core_type<tc>} {
    %c0 = arith.constant 0 : index
    %c0_0 = arith.constant 0 : index
    %0 = vector.load %arg2[%c0, %c0_0] : memref<128x32xf32, #tpu.memory_space<vmem>>, vector<128x32xf32>
    %1 = tpu.iota {dimensions = array<i32: 1>} : vector<8x128xi32>
    %c0_1 = arith.constant 0 : index
    %c0_2 = arith.constant 0 : index
    %2 = vector.load %arg0[%c0_1, %c0_2] : memref<8x1xi32, #tpu.memory_space<vmem>>, vector<8x1xi32>
    %3 = vector.broadcast %2 : vector<8x1xi32> to vector<8x128xi32>
    %4 = arith.cmpi eq, %3, %1 : vector<8x128xi32>
    %5 = arith.extui %4 : vector<8x128xi1> to vector<8x128xi32>
    %6 = arith.sitofp %5 : vector<8x128xi32> to vector<8x128xf32>
    %cst = arith.constant dense<0.000000e+00> : vector<8x32xf32>
    %7 = tpu.matmul %6, %0, %cst {dimension_numbers = #tpu.dot_dimension_numbers<[1], [0], [0], [1], [0, 0, 1, 1], [], []>} : vector<8x128xf32>, vector<128x32xf32>, vector<8x32xf32> -> vector<8x32xf32>
    %8 = tpu.iota {dimensions = array<i32: 1>} : vector<64x128xi32>
    %c0_3 = arith.constant 0 : index
    %c0_4 = arith.constant 0 : index
    %9 = vector.load %arg1[%c0_3, %c0_4] : memref<64x1xi32, #tpu.memory_space<vmem>>, vector<64x1xi32>
    %10 = vector.broadcast %9 : vector<64x1xi32> to vector<64x128xi32>
    %11 = arith.cmpi eq, %10, %8 : vector<64x128xi32>
    %12 = arith.extui %11 : vector<64x128xi1> to vector<64x128xi32>
    %13 = arith.sitofp %12 : vector<64x128xi32> to vector<64x128xf32>
    %cst_5 = arith.constant dense<0.000000e+00> : vector<64x32xf32>
    %14 = tpu.matmul %13, %0, %cst_5 {dimension_numbers = #tpu.dot_dimension_numbers<[1], [0], [0], [1], [0, 0, 1, 1], [], []>} : vector<64x128xf32>, vector<128x32xf32>, vector<64x32xf32> -> vector<64x32xf32>
    %15 = arith.truncf %7 : vector<8x32xf32> to vector<8x32xbf16>
    %c0_6 = arith.constant 0 : index
    %c0_7 = arith.constant 0 : index
    %16 = vector.load %arg3[%c0_6, %c0_7] : memref<32x32xbf16, #tpu.memory_space<vmem>>, vector<32x32xbf16>
    %cst_8 = arith.constant dense<0.000000e+00> : vector<8x32xf32>
    %17 = tpu.matmul %15, %16, %cst_8 {dimension_numbers = #tpu.dot_dimension_numbers<[1], [0], [0], [1], [0, 0, 1, 1], [], []>} : vector<8x32xbf16>, vector<32x32xbf16>, vector<8x32xf32> -> vector<8x32xf32>
    %c0_9 = arith.constant 0 : index
    %c0_10 = arith.constant 0 : index
    %18 = vector.load %arg4[%c0_9, %c0_10] : memref<1x32xf32, #tpu.memory_space<vmem>>, vector<1x32xf32>
    %19 = vector.broadcast %18 : vector<1x32xf32> to vector<8x32xf32>
    %20 = arith.addf %17, %19 : vector<8x32xf32>
    %cst_11 = arith.constant 0.000000e+00 : f32
    %21 = vector.broadcast %cst_11 : f32 to vector<8x32xf32>
    %22 = arith.truncf %14 : vector<64x32xf32> to vector<64x32xbf16>
    %c0_12 = arith.constant 0 : index
    %c0_13 = arith.constant 0 : index
    %23 = vector.load %arg5[%c0_12, %c0_13] : memref<32x128xbf16, #tpu.memory_space<vmem>>, vector<32x128xbf16>
    %cst_14 = arith.constant dense<0.000000e+00> : vector<64x128xf32>
    %24 = tpu.matmul %22, %23, %cst_14 {dimension_numbers = #tpu.dot_dimension_numbers<[1], [0], [0], [1], [0, 0, 1, 1], [], []>} : vector<64x32xbf16>, vector<32x128xbf16>, vector<64x128xf32> -> vector<64x128xf32>
    %c0_15 = arith.constant 0 : index
    %c0_16 = arith.constant 0 : index
    %25 = vector.load %arg7[%c0_15, %c0_16] : memref<1x128xf32, #tpu.memory_space<vmem>>, vector<1x128xf32>
    %26 = vector.broadcast %25 : vector<1x128xf32> to vector<64x128xf32>
    %27 = arith.addf %24, %26 : vector<64x128xf32>
    %c0_17 = arith.constant 0 : index
    %c0_18 = arith.constant 0 : index
    %28 = vector.load %arg6[%c0_17, %c0_18] : memref<32x128xbf16, #tpu.memory_space<vmem>>, vector<32x128xbf16>
    %c0_19 = arith.constant 0 : index
    %c0_20 = arith.constant 0 : index
    %29 = vector.load %arg8[%c0_19, %c0_20] : memref<32x128xbf16, #tpu.memory_space<vmem>>, vector<32x128xbf16>
    %c0_21 = arith.constant 0 : index
    %c0_22 = arith.constant 0 : index
    %30 = vector.load %arg9[%c0_21, %c0_22] : memref<1x128xf32, #tpu.memory_space<vmem>>, vector<1x128xf32>
    %31 = tpu.iota {dimensions = array<i32: 1>} : vector<8x128xi32>
    %c64_i32 = arith.constant 64 : i32
    %32 = vector.broadcast %c64_i32 : i32 to vector<8x128xi32>
    %33 = arith.cmpi sge, %31, %32 : vector<8x128xi32>
    %c96_i32 = arith.constant 96 : i32
    %34 = vector.broadcast %c96_i32 : i32 to vector<8x128xi32>
    %35 = arith.cmpi slt, %31, %34 : vector<8x128xi32>
    %36 = arith.andi %33, %35 : vector<8x128xi1>
    %37 = vector.extract_strided_slice %27 {offsets = [0, 0], sizes = [8, 128], strides = [1, 1]} : vector<64x128xf32> to vector<8x128xf32>
    %38 = arith.truncf %21 : vector<8x32xf32> to vector<8x32xbf16>
    %cst_23 = arith.constant dense<0.000000e+00> : vector<8x128xf32>
    %39 = tpu.matmul %38, %28, %cst_23 {dimension_numbers = #tpu.dot_dimension_numbers<[1], [0], [0], [1], [0, 0, 1, 1], [], []>} : vector<8x32xbf16>, vector<32x128xbf16>, vector<8x128xf32> -> vector<8x128xf32>
    %40 = arith.addf %37, %39 : vector<8x128xf32>
    %cst_24 = arith.constant 2.000000e+00 : f32
    %41 = vector.broadcast %cst_24 : f32 to vector<8x128xf32>
    %42 = arith.mulf %41, %40 : vector<8x128xf32>
    %43 = arith.select %36, %42, %40 : vector<8x128xi1>, vector<8x128xf32>
    %44 = arith.negf %43 : vector<8x128xf32>
    %45 = math.exp %44 : vector<8x128xf32>
    %cst_25 = arith.constant 1.000000e+00 : f32
    %46 = vector.broadcast %cst_25 : f32 to vector<8x128xf32>
    %47 = arith.addf %46, %45 : vector<8x128xf32>
    %48 = arith.divf %46, %47 : vector<8x128xf32>
    %cst_26 = arith.constant 2.000000e+00 : f32
    %49 = vector.broadcast %cst_26 : f32 to vector<8x128xf32>
    %50 = arith.mulf %49, %48 : vector<8x128xf32>
    %cst_27 = arith.constant 1.000000e+00 : f32
    %51 = vector.broadcast %cst_27 : f32 to vector<8x128xf32>
    %52 = arith.subf %50, %51 : vector<8x128xf32>
    %53 = arith.select %36, %52, %48 : vector<8x128xi1>, vector<8x128xf32>
    %54 = vector.extract_strided_slice %53 {offsets = [0, 0], sizes = [8, 32], strides = [1, 1]} : vector<8x128xf32> to vector<8x32xf32>
    %55 = vector.extract_strided_slice %53 {offsets = [0, 32], sizes = [8, 32], strides = [1, 1]} : vector<8x128xf32> to vector<8x32xf32>
    %56 = vector.extract_strided_slice %53 {offsets = [0, 64], sizes = [8, 32], strides = [1, 1]} : vector<8x128xf32> to vector<8x32xf32>
    %57 = vector.extract_strided_slice %53 {offsets = [0, 96], sizes = [8, 32], strides = [1, 1]} : vector<8x128xf32> to vector<8x32xf32>
    %58 = arith.mulf %55, %20 : vector<8x32xf32>
    %59 = arith.mulf %54, %56 : vector<8x32xf32>
    %60 = arith.addf %58, %59 : vector<8x32xf32>
    %61 = math.tanh %60 : vector<8x32xf32>
    %62 = arith.mulf %57, %61 : vector<8x32xf32>
    %63 = arith.truncf %62 : vector<8x32xf32> to vector<8x32xbf16>
    %cst_28 = arith.constant dense<0.000000e+00> : vector<8x128xf32>
    %64 = tpu.matmul %63, %29, %cst_28 {dimension_numbers = #tpu.dot_dimension_numbers<[1], [0], [0], [1], [0, 0, 1, 1], [], []>} : vector<8x32xbf16>, vector<32x128xbf16>, vector<8x128xf32> -> vector<8x128xf32>
    %65 = vector.broadcast %30 : vector<1x128xf32> to vector<8x128xf32>
    %66 = arith.addf %64, %65 : vector<8x128xf32>
    %c0_29 = arith.constant 0 : index
    %c0_30 = arith.constant 0 : index
    %67 = vector.load %arg10[%c0_29, %c0_30] : memref<64x128xf32, #tpu.memory_space<vmem>>, vector<8x128xf32>
    tpu.vector_store %arg10[%c0_29, %c0_30], %66 {strides = array<i32>} : memref<64x128xf32, #tpu.memory_space<vmem>>, vector<8x128xf32>,
    %68 = vector.extract_strided_slice %27 {offsets = [8, 0], sizes = [8, 128], strides = [1, 1]} : vector<64x128xf32> to vector<8x128xf32>
    %69 = arith.truncf %62 : vector<8x32xf32> to vector<8x32xbf16>
    %cst_31 = arith.constant dense<0.000000e+00> : vector<8x128xf32>
    %70 = tpu.matmul %69, %28, %cst_31 {dimension_numbers = #tpu.dot_dimension_numbers<[1], [0], [0], [1], [0, 0, 1, 1], [], []>} : vector<8x32xbf16>, vector<32x128xbf16>, vector<8x128xf32> -> vector<8x128xf32>
    %71 = arith.addf %68, %70 : vector<8x128xf32>
    %cst_32 = arith.constant 2.000000e+00 : f32
    %72 = vector.broadcast %cst_32 : f32 to vector<8x128xf32>
    %73 = arith.mulf %72, %71 : vector<8x128xf32>
    %74 = arith.select %36, %73, %71 : vector<8x128xi1>, vector<8x128xf32>
    %75 = arith.negf %74 : vector<8x128xf32>
    %76 = math.exp %75 : vector<8x128xf32>
    %cst_33 = arith.constant 1.000000e+00 : f32
    %77 = vector.broadcast %cst_33 : f32 to vector<8x128xf32>
    %78 = arith.addf %77, %76 : vector<8x128xf32>
    %79 = arith.divf %77, %78 : vector<8x128xf32>
    %cst_34 = arith.constant 2.000000e+00 : f32
    %80 = vector.broadcast %cst_34 : f32 to vector<8x128xf32>
    %81 = arith.mulf %80, %79 : vector<8x128xf32>
    %cst_35 = arith.constant 1.000000e+00 : f32
    %82 = vector.broadcast %cst_35 : f32 to vector<8x128xf32>
    %83 = arith.subf %81, %82 : vector<8x128xf32>
    %84 = arith.select %36, %83, %79 : vector<8x128xi1>, vector<8x128xf32>
    %85 = vector.extract_strided_slice %84 {offsets = [0, 0], sizes = [8, 32], strides = [1, 1]} : vector<8x128xf32> to vector<8x32xf32>
    %86 = vector.extract_strided_slice %84 {offsets = [0, 32], sizes = [8, 32], strides = [1, 1]} : vector<8x128xf32> to vector<8x32xf32>
    %87 = vector.extract_strided_slice %84 {offsets = [0, 64], sizes = [8, 32], strides = [1, 1]} : vector<8x128xf32> to vector<8x32xf32>
    %88 = vector.extract_strided_slice %84 {offsets = [0, 96], sizes = [8, 32], strides = [1, 1]} : vector<8x128xf32> to vector<8x32xf32>
    %89 = arith.mulf %86, %60 : vector<8x32xf32>
    %90 = arith.mulf %85, %87 : vector<8x32xf32>
    %91 = arith.addf %89, %90 : vector<8x32xf32>
    %92 = math.tanh %91 : vector<8x32xf32>
    %93 = arith.mulf %88, %92 : vector<8x32xf32>
    %94 = arith.truncf %93 : vector<8x32xf32> to vector<8x32xbf16>
    %cst_36 = arith.constant dense<0.000000e+00> : vector<8x128xf32>
    %95 = tpu.matmul %94, %29, %cst_36 {dimension_numbers = #tpu.dot_dimension_numbers<[1], [0], [0], [1], [0, 0, 1, 1], [], []>} : vector<8x32xbf16>, vector<32x128xbf16>, vector<8x128xf32> -> vector<8x128xf32>
    %96 = vector.broadcast %30 : vector<1x128xf32> to vector<8x128xf32>
    %97 = arith.addf %95, %96 : vector<8x128xf32>
    %c8 = arith.constant 8 : index
    %c0_37 = arith.constant 0 : index
    %98 = vector.load %arg10[%c8, %c0_37] : memref<64x128xf32, #tpu.memory_space<vmem>>, vector<8x128xf32>
    tpu.vector_store %arg10[%c8, %c0_37], %97 {strides = array<i32>} : memref<64x128xf32, #tpu.memory_space<vmem>>, vector<8x128xf32>,
    %99 = vector.extract_strided_slice %27 {offsets = [16, 0], sizes = [8, 128], strides = [1, 1]} : vector<64x128xf32> to vector<8x128xf32>
    %100 = arith.truncf %93 : vector<8x32xf32> to vector<8x32xbf16>
    %cst_38 = arith.constant dense<0.000000e+00> : vector<8x128xf32>
    %101 = tpu.matmul %100, %28, %cst_38 {dimension_numbers = #tpu.dot_dimension_numbers<[1], [0], [0], [1], [0, 0, 1, 1], [], []>} : vector<8x32xbf16>, vector<32x128xbf16>, vector<8x128xf32> -> vector<8x128xf32>
    %102 = arith.addf %99, %101 : vector<8x128xf32>
    %cst_39 = arith.constant 2.000000e+00 : f32
    %103 = vector.broadcast %cst_39 : f32 to vector<8x128xf32>
    %104 = arith.mulf %103, %102 : vector<8x128xf32>
    %105 = arith.select %36, %104, %102 : vector<8x128xi1>, vector<8x128xf32>
    %106 = arith.negf %105 : vector<8x128xf32>
    %107 = math.exp %106 : vector<8x128xf32>
    %cst_40 = arith.constant 1.000000e+00 : f32
    %108 = vector.broadcast %cst_40 : f32 to vector<8x128xf32>
    %109 = arith.addf %108, %107 : vector<8x128xf32>
    %110 = arith.divf %108, %109 : vector<8x128xf32>
    %cst_41 = arith.constant 2.000000e+00 : f32
    %111 = vector.broadcast %cst_41 : f32 to vector<8x128xf32>
    %112 = arith.mulf %111, %110 : vector<8x128xf32>
    %cst_42 = arith.constant 1.000000e+00 : f32
    %113 = vector.broadcast %cst_42 : f32 to vector<8x128xf32>
    %114 = arith.subf %112, %113 : vector<8x128xf32>
    %115 = arith.select %36, %114, %110 : vector<8x128xi1>, vector<8x128xf32>
    %116 = vector.extract_strided_slice %115 {offsets = [0, 0], sizes = [8, 32], strides = [1, 1]} : vector<8x128xf32> to vector<8x32xf32>
    %117 = vector.extract_strided_slice %115 {offsets = [0, 32], sizes = [8, 32], strides = [1, 1]} : vector<8x128xf32> to vector<8x32xf32>
    %118 = vector.extract_strided_slice %115 {offsets = [0, 64], sizes = [8, 32], strides = [1, 1]} : vector<8x128xf32> to vector<8x32xf32>
    %119 = vector.extract_strided_slice %115 {offsets = [0, 96], sizes = [8, 32], strides = [1, 1]} : vector<8x128xf32> to vector<8x32xf32>
    %120 = arith.mulf %117, %91 : vector<8x32xf32>
    %121 = arith.mulf %116, %118 : vector<8x32xf32>
    %122 = arith.addf %120, %121 : vector<8x32xf32>
    %123 = math.tanh %122 : vector<8x32xf32>
    %124 = arith.mulf %119, %123 : vector<8x32xf32>
    %125 = arith.truncf %124 : vector<8x32xf32> to vector<8x32xbf16>
    %cst_43 = arith.constant dense<0.000000e+00> : vector<8x128xf32>
    %126 = tpu.matmul %125, %29, %cst_43 {dimension_numbers = #tpu.dot_dimension_numbers<[1], [0], [0], [1], [0, 0, 1, 1], [], []>} : vector<8x32xbf16>, vector<32x128xbf16>, vector<8x128xf32> -> vector<8x128xf32>
    %127 = vector.broadcast %30 : vector<1x128xf32> to vector<8x128xf32>
    %128 = arith.addf %126, %127 : vector<8x128xf32>
    %c16 = arith.constant 16 : index
    %c0_44 = arith.constant 0 : index
    %129 = vector.load %arg10[%c16, %c0_44] : memref<64x128xf32, #tpu.memory_space<vmem>>, vector<8x128xf32>
    tpu.vector_store %arg10[%c16, %c0_44], %128 {strides = array<i32>} : memref<64x128xf32, #tpu.memory_space<vmem>>, vector<8x128xf32>,
    %130 = vector.extract_strided_slice %27 {offsets = [24, 0], sizes = [8, 128], strides = [1, 1]} : vector<64x128xf32> to vector<8x128xf32>
    %131 = arith.truncf %124 : vector<8x32xf32> to vector<8x32xbf16>
    %cst_45 = arith.constant dense<0.000000e+00> : vector<8x128xf32>
    %132 = tpu.matmul %131, %28, %cst_45 {dimension_numbers = #tpu.dot_dimension_numbers<[1], [0], [0], [1], [0, 0, 1, 1], [], []>} : vector<8x32xbf16>, vector<32x128xbf16>, vector<8x128xf32> -> vector<8x128xf32>
    %133 = arith.addf %130, %132 : vector<8x128xf32>
    %cst_46 = arith.constant 2.000000e+00 : f32
    %134 = vector.broadcast %cst_46 : f32 to vector<8x128xf32>
    %135 = arith.mulf %134, %133 : vector<8x128xf32>
    %136 = arith.select %36, %135, %133 : vector<8x128xi1>, vector<8x128xf32>
    %137 = arith.negf %136 : vector<8x128xf32>
    %138 = math.exp %137 : vector<8x128xf32>
    %cst_47 = arith.constant 1.000000e+00 : f32
    %139 = vector.broadcast %cst_47 : f32 to vector<8x128xf32>
    %140 = arith.addf %139, %138 : vector<8x128xf32>
    %141 = arith.divf %139, %140 : vector<8x128xf32>
    %cst_48 = arith.constant 2.000000e+00 : f32
    %142 = vector.broadcast %cst_48 : f32 to vector<8x128xf32>
    %143 = arith.mulf %142, %141 : vector<8x128xf32>
    %cst_49 = arith.constant 1.000000e+00 : f32
    %144 = vector.broadcast %cst_49 : f32 to vector<8x128xf32>
    %145 = arith.subf %143, %144 : vector<8x128xf32>
    %146 = arith.select %36, %145, %141 : vector<8x128xi1>, vector<8x128xf32>
    %147 = vector.extract_strided_slice %146 {offsets = [0, 0], sizes = [8, 32], strides = [1, 1]} : vector<8x128xf32> to vector<8x32xf32>
    %148 = vector.extract_strided_slice %146 {offsets = [0, 32], sizes = [8, 32], strides = [1, 1]} : vector<8x128xf32> to vector<8x32xf32>
    %149 = vector.extract_strided_slice %146 {offsets = [0, 64], sizes = [8, 32], strides = [1, 1]} : vector<8x128xf32> to vector<8x32xf32>
    %150 = vector.extract_strided_slice %146 {offsets = [0, 96], sizes = [8, 32], strides = [1, 1]} : vector<8x128xf32> to vector<8x32xf32>
    %151 = arith.mulf %148, %122 : vector<8x32xf32>
    %152 = arith.mulf %147, %149 : vector<8x32xf32>
    %153 = arith.addf %151, %152 : vector<8x32xf32>
    %154 = math.tanh %153 : vector<8x32xf32>
    %155 = arith.mulf %150, %154 : vector<8x32xf32>
    %156 = arith.truncf %155 : vector<8x32xf32> to vector<8x32xbf16>
    %cst_50 = arith.constant dense<0.000000e+00> : vector<8x128xf32>
    %157 = tpu.matmul %156, %29, %cst_50 {dimension_numbers = #tpu.dot_dimension_numbers<[1], [0], [0], [1], [0, 0, 1, 1], [], []>} : vector<8x32xbf16>, vector<32x128xbf16>, vector<8x128xf32> -> vector<8x128xf32>
    %158 = vector.broadcast %30 : vector<1x128xf32> to vector<8x128xf32>
    %159 = arith.addf %157, %158 : vector<8x128xf32>
    %c24 = arith.constant 24 : index
    %c0_51 = arith.constant 0 : index
    %160 = vector.load %arg10[%c24, %c0_51] : memref<64x128xf32, #tpu.memory_space<vmem>>, vector<8x128xf32>
    tpu.vector_store %arg10[%c24, %c0_51], %159 {strides = array<i32>} : memref<64x128xf32, #tpu.memory_space<vmem>>, vector<8x128xf32>,
    %161 = vector.extract_strided_slice %27 {offsets = [32, 0], sizes = [8, 128], strides = [1, 1]} : vector<64x128xf32> to vector<8x128xf32>
    %162 = arith.truncf %155 : vector<8x32xf32> to vector<8x32xbf16>
    %cst_52 = arith.constant dense<0.000000e+00> : vector<8x128xf32>
    %163 = tpu.matmul %162, %28, %cst_52 {dimension_numbers = #tpu.dot_dimension_numbers<[1], [0], [0], [1], [0, 0, 1, 1], [], []>} : vector<8x32xbf16>, vector<32x128xbf16>, vector<8x128xf32> -> vector<8x128xf32>
    %164 = arith.addf %161, %163 : vector<8x128xf32>
    %cst_53 = arith.constant 2.000000e+00 : f32
    %165 = vector.broadcast %cst_53 : f32 to vector<8x128xf32>
    %166 = arith.mulf %165, %164 : vector<8x128xf32>
    %167 = arith.select %36, %166, %164 : vector<8x128xi1>, vector<8x128xf32>
    %168 = arith.negf %167 : vector<8x128xf32>
    %169 = math.exp %168 : vector<8x128xf32>
    %cst_54 = arith.constant 1.000000e+00 : f32
    %170 = vector.broadcast %cst_54 : f32 to vector<8x128xf32>
    %171 = arith.addf %170, %169 : vector<8x128xf32>
    %172 = arith.divf %170, %171 : vector<8x128xf32>
    %cst_55 = arith.constant 2.000000e+00 : f32
    %173 = vector.broadcast %cst_55 : f32 to vector<8x128xf32>
    %174 = arith.mulf %173, %172 : vector<8x128xf32>
    %cst_56 = arith.constant 1.000000e+00 : f32
    %175 = vector.broadcast %cst_56 : f32 to vector<8x128xf32>
    %176 = arith.subf %174, %175 : vector<8x128xf32>
    %177 = arith.select %36, %176, %172 : vector<8x128xi1>, vector<8x128xf32>
    %178 = vector.extract_strided_slice %177 {offsets = [0, 0], sizes = [8, 32], strides = [1, 1]} : vector<8x128xf32> to vector<8x32xf32>
    %179 = vector.extract_strided_slice %177 {offsets = [0, 32], sizes = [8, 32], strides = [1, 1]} : vector<8x128xf32> to vector<8x32xf32>
    %180 = vector.extract_strided_slice %177 {offsets = [0, 64], sizes = [8, 32], strides = [1, 1]} : vector<8x128xf32> to vector<8x32xf32>
    %181 = vector.extract_strided_slice %177 {offsets = [0, 96], sizes = [8, 32], strides = [1, 1]} : vector<8x128xf32> to vector<8x32xf32>
    %182 = arith.mulf %179, %153 : vector<8x32xf32>
    %183 = arith.mulf %178, %180 : vector<8x32xf32>
    %184 = arith.addf %182, %183 : vector<8x32xf32>
    %185 = math.tanh %184 : vector<8x32xf32>
    %186 = arith.mulf %181, %185 : vector<8x32xf32>
    %187 = arith.truncf %186 : vector<8x32xf32> to vector<8x32xbf16>
    %cst_57 = arith.constant dense<0.000000e+00> : vector<8x128xf32>
    %188 = tpu.matmul %187, %29, %cst_57 {dimension_numbers = #tpu.dot_dimension_numbers<[1], [0], [0], [1], [0, 0, 1, 1], [], []>} : vector<8x32xbf16>, vector<32x128xbf16>, vector<8x128xf32> -> vector<8x128xf32>
    %189 = vector.broadcast %30 : vector<1x128xf32> to vector<8x128xf32>
    %190 = arith.addf %188, %189 : vector<8x128xf32>
    %c32 = arith.constant 32 : index
    %c0_58 = arith.constant 0 : index
    %191 = vector.load %arg10[%c32, %c0_58] : memref<64x128xf32, #tpu.memory_space<vmem>>, vector<8x128xf32>
    tpu.vector_store %arg10[%c32, %c0_58], %190 {strides = array<i32>} : memref<64x128xf32, #tpu.memory_space<vmem>>, vector<8x128xf32>,
    %192 = vector.extract_strided_slice %27 {offsets = [40, 0], sizes = [8, 128], strides = [1, 1]} : vector<64x128xf32> to vector<8x128xf32>
    %193 = arith.truncf %186 : vector<8x32xf32> to vector<8x32xbf16>
    %cst_59 = arith.constant dense<0.000000e+00> : vector<8x128xf32>
    %194 = tpu.matmul %193, %28, %cst_59 {dimension_numbers = #tpu.dot_dimension_numbers<[1], [0], [0], [1], [0, 0, 1, 1], [], []>} : vector<8x32xbf16>, vector<32x128xbf16>, vector<8x128xf32> -> vector<8x128xf32>
    %195 = arith.addf %192, %194 : vector<8x128xf32>
    %cst_60 = arith.constant 2.000000e+00 : f32
    %196 = vector.broadcast %cst_60 : f32 to vector<8x128xf32>
    %197 = arith.mulf %196, %195 : vector<8x128xf32>
    %198 = arith.select %36, %197, %195 : vector<8x128xi1>, vector<8x128xf32>
    %199 = arith.negf %198 : vector<8x128xf32>
    %200 = math.exp %199 : vector<8x128xf32>
    %cst_61 = arith.constant 1.000000e+00 : f32
    %201 = vector.broadcast %cst_61 : f32 to vector<8x128xf32>
    %202 = arith.addf %201, %200 : vector<8x128xf32>
    %203 = arith.divf %201, %202 : vector<8x128xf32>
    %cst_62 = arith.constant 2.000000e+00 : f32
    %204 = vector.broadcast %cst_62 : f32 to vector<8x128xf32>
    %205 = arith.mulf %204, %203 : vector<8x128xf32>
    %cst_63 = arith.constant 1.000000e+00 : f32
    %206 = vector.broadcast %cst_63 : f32 to vector<8x128xf32>
    %207 = arith.subf %205, %206 : vector<8x128xf32>
    %208 = arith.select %36, %207, %203 : vector<8x128xi1>, vector<8x128xf32>
    %209 = vector.extract_strided_slice %208 {offsets = [0, 0], sizes = [8, 32], strides = [1, 1]} : vector<8x128xf32> to vector<8x32xf32>
    %210 = vector.extract_strided_slice %208 {offsets = [0, 32], sizes = [8, 32], strides = [1, 1]} : vector<8x128xf32> to vector<8x32xf32>
    %211 = vector.extract_strided_slice %208 {offsets = [0, 64], sizes = [8, 32], strides = [1, 1]} : vector<8x128xf32> to vector<8x32xf32>
    %212 = vector.extract_strided_slice %208 {offsets = [0, 96], sizes = [8, 32], strides = [1, 1]} : vector<8x128xf32> to vector<8x32xf32>
    %213 = arith.mulf %210, %184 : vector<8x32xf32>
    %214 = arith.mulf %209, %211 : vector<8x32xf32>
    %215 = arith.addf %213, %214 : vector<8x32xf32>
    %216 = math.tanh %215 : vector<8x32xf32>
    %217 = arith.mulf %212, %216 : vector<8x32xf32>
    %218 = arith.truncf %217 : vector<8x32xf32> to vector<8x32xbf16>
    %cst_64 = arith.constant dense<0.000000e+00> : vector<8x128xf32>
    %219 = tpu.matmul %218, %29, %cst_64 {dimension_numbers = #tpu.dot_dimension_numbers<[1], [0], [0], [1], [0, 0, 1, 1], [], []>} : vector<8x32xbf16>, vector<32x128xbf16>, vector<8x128xf32> -> vector<8x128xf32>
    %220 = vector.broadcast %30 : vector<1x128xf32> to vector<8x128xf32>
    %221 = arith.addf %219, %220 : vector<8x128xf32>
    %c40 = arith.constant 40 : index
    %c0_65 = arith.constant 0 : index
    %222 = vector.load %arg10[%c40, %c0_65] : memref<64x128xf32, #tpu.memory_space<vmem>>, vector<8x128xf32>
    tpu.vector_store %arg10[%c40, %c0_65], %221 {strides = array<i32>} : memref<64x128xf32, #tpu.memory_space<vmem>>, vector<8x128xf32>,
    %223 = vector.extract_strided_slice %27 {offsets = [48, 0], sizes = [8, 128], strides = [1, 1]} : vector<64x128xf32> to vector<8x128xf32>
    %224 = arith.truncf %217 : vector<8x32xf32> to vector<8x32xbf16>
    %cst_66 = arith.constant dense<0.000000e+00> : vector<8x128xf32>
    %225 = tpu.matmul %224, %28, %cst_66 {dimension_numbers = #tpu.dot_dimension_numbers<[1], [0], [0], [1], [0, 0, 1, 1], [], []>} : vector<8x32xbf16>, vector<32x128xbf16>, vector<8x128xf32> -> vector<8x128xf32>
    %226 = arith.addf %223, %225 : vector<8x128xf32>
    %cst_67 = arith.constant 2.000000e+00 : f32
    %227 = vector.broadcast %cst_67 : f32 to vector<8x128xf32>
    %228 = arith.mulf %227, %226 : vector<8x128xf32>
    %229 = arith.select %36, %228, %226 : vector<8x128xi1>, vector<8x128xf32>
    %230 = arith.negf %229 : vector<8x128xf32>
    %231 = math.exp %230 : vector<8x128xf32>
    %cst_68 = arith.constant 1.000000e+00 : f32
    %232 = vector.broadcast %cst_68 : f32 to vector<8x128xf32>
    %233 = arith.addf %232, %231 : vector<8x128xf32>
    %234 = arith.divf %232, %233 : vector<8x128xf32>
    %cst_69 = arith.constant 2.000000e+00 : f32
    %235 = vector.broadcast %cst_69 : f32 to vector<8x128xf32>
    %236 = arith.mulf %235, %234 : vector<8x128xf32>
    %cst_70 = arith.constant 1.000000e+00 : f32
    %237 = vector.broadcast %cst_70 : f32 to vector<8x128xf32>
    %238 = arith.subf %236, %237 : vector<8x128xf32>
    %239 = arith.select %36, %238, %234 : vector<8x128xi1>, vector<8x128xf32>
    %240 = vector.extract_strided_slice %239 {offsets = [0, 0], sizes = [8, 32], strides = [1, 1]} : vector<8x128xf32> to vector<8x32xf32>
    %241 = vector.extract_strided_slice %239 {offsets = [0, 32], sizes = [8, 32], strides = [1, 1]} : vector<8x128xf32> to vector<8x32xf32>
    %242 = vector.extract_strided_slice %239 {offsets = [0, 64], sizes = [8, 32], strides = [1, 1]} : vector<8x128xf32> to vector<8x32xf32>
    %243 = vector.extract_strided_slice %239 {offsets = [0, 96], sizes = [8, 32], strides = [1, 1]} : vector<8x128xf32> to vector<8x32xf32>
    %244 = arith.mulf %241, %215 : vector<8x32xf32>
    %245 = arith.mulf %240, %242 : vector<8x32xf32>
    %246 = arith.addf %244, %245 : vector<8x32xf32>
    %247 = math.tanh %246 : vector<8x32xf32>
    %248 = arith.mulf %243, %247 : vector<8x32xf32>
    %249 = arith.truncf %248 : vector<8x32xf32> to vector<8x32xbf16>
    %cst_71 = arith.constant dense<0.000000e+00> : vector<8x128xf32>
    %250 = tpu.matmul %249, %29, %cst_71 {dimension_numbers = #tpu.dot_dimension_numbers<[1], [0], [0], [1], [0, 0, 1, 1], [], []>} : vector<8x32xbf16>, vector<32x128xbf16>, vector<8x128xf32> -> vector<8x128xf32>
    %251 = vector.broadcast %30 : vector<1x128xf32> to vector<8x128xf32>
    %252 = arith.addf %250, %251 : vector<8x128xf32>
    %c48 = arith.constant 48 : index
    %c0_72 = arith.constant 0 : index
    %253 = vector.load %arg10[%c48, %c0_72] : memref<64x128xf32, #tpu.memory_space<vmem>>, vector<8x128xf32>
    tpu.vector_store %arg10[%c48, %c0_72], %252 {strides = array<i32>} : memref<64x128xf32, #tpu.memory_space<vmem>>, vector<8x128xf32>,
    %254 = vector.extract_strided_slice %27 {offsets = [56, 0], sizes = [8, 128], strides = [1, 1]} : vector<64x128xf32> to vector<8x128xf32>
    %255 = arith.truncf %248 : vector<8x32xf32> to vector<8x32xbf16>
    %cst_73 = arith.constant dense<0.000000e+00> : vector<8x128xf32>
    %256 = tpu.matmul %255, %28, %cst_73 {dimension_numbers = #tpu.dot_dimension_numbers<[1], [0], [0], [1], [0, 0, 1, 1], [], []>} : vector<8x32xbf16>, vector<32x128xbf16>, vector<8x128xf32> -> vector<8x128xf32>
    %257 = arith.addf %254, %256 : vector<8x128xf32>
    %cst_74 = arith.constant 2.000000e+00 : f32
    %258 = vector.broadcast %cst_74 : f32 to vector<8x128xf32>
    %259 = arith.mulf %258, %257 : vector<8x128xf32>
    %260 = arith.select %36, %259, %257 : vector<8x128xi1>, vector<8x128xf32>
    %261 = arith.negf %260 : vector<8x128xf32>
    %262 = math.exp %261 : vector<8x128xf32>
    %cst_75 = arith.constant 1.000000e+00 : f32
    %263 = vector.broadcast %cst_75 : f32 to vector<8x128xf32>
    %264 = arith.addf %263, %262 : vector<8x128xf32>
    %265 = arith.divf %263, %264 : vector<8x128xf32>
    %cst_76 = arith.constant 2.000000e+00 : f32
    %266 = vector.broadcast %cst_76 : f32 to vector<8x128xf32>
    %267 = arith.mulf %266, %265 : vector<8x128xf32>
    %cst_77 = arith.constant 1.000000e+00 : f32
    %268 = vector.broadcast %cst_77 : f32 to vector<8x128xf32>
    %269 = arith.subf %267, %268 : vector<8x128xf32>
    %270 = arith.select %36, %269, %265 : vector<8x128xi1>, vector<8x128xf32>
    %271 = vector.extract_strided_slice %270 {offsets = [0, 0], sizes = [8, 32], strides = [1, 1]} : vector<8x128xf32> to vector<8x32xf32>
    %272 = vector.extract_strided_slice %270 {offsets = [0, 32], sizes = [8, 32], strides = [1, 1]} : vector<8x128xf32> to vector<8x32xf32>
    %273 = vector.extract_strided_slice %270 {offsets = [0, 64], sizes = [8, 32], strides = [1, 1]} : vector<8x128xf32> to vector<8x32xf32>
    %274 = vector.extract_strided_slice %270 {offsets = [0, 96], sizes = [8, 32], strides = [1, 1]} : vector<8x128xf32> to vector<8x32xf32>
    %275 = arith.mulf %272, %246 : vector<8x32xf32>
    %276 = arith.mulf %271, %273 : vector<8x32xf32>
    %277 = arith.addf %275, %276 : vector<8x32xf32>
    %278 = math.tanh %277 : vector<8x32xf32>
    %279 = arith.mulf %274, %278 : vector<8x32xf32>
    %280 = arith.truncf %279 : vector<8x32xf32> to vector<8x32xbf16>
    %cst_78 = arith.constant dense<0.000000e+00> : vector<8x128xf32>
    %281 = tpu.matmul %280, %29, %cst_78 {dimension_numbers = #tpu.dot_dimension_numbers<[1], [0], [0], [1], [0, 0, 1, 1], [], []>} : vector<8x32xbf16>, vector<32x128xbf16>, vector<8x128xf32> -> vector<8x128xf32>
    %282 = vector.broadcast %30 : vector<1x128xf32> to vector<8x128xf32>
    %283 = arith.addf %281, %282 : vector<8x128xf32>
    %c56 = arith.constant 56 : index
    %c0_79 = arith.constant 0 : index
    %284 = vector.load %arg10[%c56, %c0_79] : memref<64x128xf32, #tpu.memory_space<vmem>>, vector<8x128xf32>
    tpu.vector_store %arg10[%c56, %c0_79], %283 {strides = array<i32>} : memref<64x128xf32, #tpu.memory_space<vmem>>, vector<8x128xf32>,
    %c0_80 = arith.constant 0 : index
    %c0_81 = arith.constant 0 : index
    %285 = vector.load %arg11[%c0_80, %c0_81] : memref<8x32xf32, #tpu.memory_space<vmem>>, vector<8x32xf32>
    tpu.vector_store %arg11[%c0_80, %c0_81], %279 {strides = array<i32>} : memref<8x32xf32, #tpu.memory_space<vmem>>, vector<8x32xf32>,
    %c0_82 = arith.constant 0 : index
    %c0_83 = arith.constant 0 : index
    %286 = vector.load %arg12[%c0_82, %c0_83] : memref<8x32xf32, #tpu.memory_space<vmem>>, vector<8x32xf32>
    tpu.vector_store %arg12[%c0_82, %c0_83], %277 {strides = array<i32>} : memref<8x32xf32, #tpu.memory_space<vmem>>, vector<8x32xf32>,
    return
  }
}

</mosaic_0001>

<llo_original>
// kernel: tpu_custom_call.1
$region0: #{tpu_custom_call.1}
  #allocation0 [shape = 'u32[]', space=smem, size = 0x4, offset = 0x4, fixed_abs, tag = 'smem constant byte address 0x4 - core index']
  #allocation1 [shape = 'u32[144,128]{1,0:T(1,128)}', space=vmem, size = 0x12000, scoped, tag = 'internal scratch']
  %s0 = inlined_call_operand.vmem [shape: s32[8,1], index: 0, kind: input, shape index: {}]
  %s1 = inlined_call_operand.vmem [shape: s32[64,1], index: 1, kind: input, shape index: {}]
  %s2 = inlined_call_operand.vmem [shape: f32[128,32], index: 2, kind: input, shape index: {}]
  %s3 = inlined_call_operand.vmem [shape: bf16[32,32], index: 3, kind: input, shape index: {}]
  %s4 = inlined_call_operand.vmem [shape: f32[1,32], index: 4, kind: input, shape index: {}]
  %s5 = inlined_call_operand.vmem [shape: bf16[32,128], index: 5, kind: input, shape index: {}]
  %s6 = inlined_call_operand.vmem [shape: bf16[32,128], index: 6, kind: input, shape index: {}]
  %s7 = inlined_call_operand.vmem [shape: f32[1,128], index: 7, kind: input, shape index: {}]
  %s8 = inlined_call_operand.vmem [shape: bf16[32,128], index: 8, kind: input, shape index: {}]
  %s9 = inlined_call_operand.vmem [shape: f32[1,128], index: 9, kind: input, shape index: {}]
  %s10 = inlined_call_operand.hbm [shape: f32[64,128], index: 10, kind: output, shape index: {0}]
  %s11 = inlined_call_operand.hbm [shape: f32[8,32], index: 11, kind: output, shape index: {1}]
  %s12 = inlined_call_operand.hbm [shape: f32[8,32], index: 12, kind: output, shape index: {2}]
  %13 = xla_tuple %s10, %s11, %s12
  %s14 = sld [smem:[#allocation0]]
  $region66: #{tpu_custom_call.1} parent=0
    _
  %s16 = ssub.s32 1, %s14
  %s17 = scalar_select 0, %s16, %s14
  $region1: #{tpu_custom_call.1} parent=0
    #allocation2 [shape = 'u8[32768]{0}', space=vmem, size = 0x8000, scoped, tag = 'output window, operand 0, single buffered']
    #allocation3 [shape = 's32[1]{0}', space=sflag, size = 0x4, scoped, tag = 'scoped memory for tpu_custom_call.1']
    #allocation4 [shape = 'u8[4096]{0}', space=vmem, size = 0x1000, scoped, tag = 'output window, operand 1, single buffered']
    #allocation5 [shape = 's32[1]{0}', space=sflag, size = 0x4, scoped, tag = 'scoped memory for tpu_custom_call.1']
    #allocation6 [shape = 'u8[4096]{0}', space=vmem, size = 0x1000, scoped, tag = 'output window, operand 2, single buffered']
    %18 = vsyncpa [#allocation3], 0
    %19 = vsyncpa [#allocation5], 0
    // Predicated region
    $region2: #{tpu_custom_call.1} parent=1 // pred_check
      _
    $region3: #{tpu_custom_call.1} parent=1 // pred_check_branch
      %21 = sbr.rel (0) target = $region5
    $region4: #{tpu_custom_call.1} parent=1 // pred_region
      _
    $region5: #{tpu_custom_call.1} parent=1 // pred_fallthru
      _
    // Predicated region
    $region6: #{tpu_custom_call.1} parent=1 // pred_check
      _
    $region7: #{tpu_custom_call.1} parent=1 // pred_check_branch
      %23 = sbr.rel (0) target = $region9
    $region8: #{tpu_custom_call.1} parent=1 // pred_region
      _
    $region9: #{tpu_custom_call.1} parent=1 // pred_fallthru
      _
    // Predicated region
    $region10: #{tpu_custom_call.1} parent=1 // pred_check
      _
    $region11: #{tpu_custom_call.1} parent=1 // pred_check_branch
      %25 = sbr.rel (0) target = $region13
    $region12: #{tpu_custom_call.1} parent=1 // pred_region
      _
    $region13: #{tpu_custom_call.1} parent=1 // pred_fallthru
      _
    // Predicated region
    $region14: #{tpu_custom_call.1} parent=1 // pred_check
      _
    $region15: #{tpu_custom_call.1} parent=1 // pred_check_branch
      %27 = sbr.rel (0) target = $region17
    $region16: #{tpu_custom_call.1} parent=1 // pred_region
      _
    $region17: #{tpu_custom_call.1} parent=1 // pred_fallthru
      _
    // Predicated region
    $region18: #{tpu_custom_call.1} parent=1 // pred_check
      _
    $region19: #{tpu_custom_call.1} parent=1 // pred_check_branch
      %29 = sbr.rel (0) target = $region21
    $region20: #{tpu_custom_call.1} parent=1 // pred_region
      _
    $region21: #{tpu_custom_call.1} parent=1 // pred_fallthru
      _
    // Predicated region
    $region22: #{tpu_custom_call.1} parent=1 // pred_check
      _
    $region23: #{tpu_custom_call.1} parent=1 // pred_check_branch
      %31 = sbr.rel (0) target = $region25
    $region24: #{tpu_custom_call.1} parent=1 // pred_region
      _
    $region25: #{tpu_custom_call.1} parent=1 // pred_fallthru
      _
    // Predicated region
    $region26: #{tpu_custom_call.1} parent=1 // pred_check
      _
    $region27: #{tpu_custom_call.1} parent=1 // pred_check_branch
      %33 = sbr.rel (0) target = $region29
    $region28: #{tpu_custom_call.1} parent=1 // pred_region
      _
    $region29: #{tpu_custom_call.1} parent=1 // pred_fallthru
      _
    // Predicated region
    $region30: #{tpu_custom_call.1} parent=1 // pred_check
      _
    $region31: #{tpu_custom_call.1} parent=1 // pred_check_branch
      %35 = sbr.rel (0) target = $region33
    $region32: #{tpu_custom_call.1} parent=1 // pred_region
      _
    $region33: #{tpu_custom_call.1} parent=1 // pred_fallthru
      _
    // Predicated region
    $region34: #{tpu_custom_call.1} parent=1 // pred_check
      _
    $region35: #{tpu_custom_call.1} parent=1 // pred_check_branch
      %37 = sbr.rel (0) target = $region37
    $region36: #{tpu_custom_call.1} parent=1 // pred_region
      _
    $region37: #{tpu_custom_call.1} parent=1 // pred_fallthru
      _
    // Predicated region
    $region38: #{tpu_custom_call.1} parent=1 // pred_check
      _
    $region39: #{tpu_custom_call.1} parent=1 // pred_check_branch
      %39 = sbr.rel (0) target = $region41
    $region40: #{tpu_custom_call.1} parent=1 // pred_region
      _
    $region41: #{tpu_custom_call.1} parent=1 // pred_fallthru
      _
    %v41 = vld [vmem:[%s2] sm:$0xff]
    %v42 = vld [vmem:[%s2 + $0x8] sm:$0xff]
    %v43 = vld [vmem:[%s2 + $0x10] sm:$0xff]
    %v44 = vld [vmem:[%s2 + $0x18] sm:$0xff]
    %v45 = vld [vmem:[%s2 + $0x20] sm:$0xff]
    %v46 = vld [vmem:[%s2 + $0x28] sm:$0xff]
    %v47 = vld [vmem:[%s2 + $0x30] sm:$0xff]
    %v48 = vld [vmem:[%s2 + $0x38] sm:$0xff]
    %v49 = vld [vmem:[%s2 + $0x40] sm:$0xff]
    %v50 = vld [vmem:[%s2 + $0x48] sm:$0xff]
    %v51 = vld [vmem:[%s2 + $0x50] sm:$0xff]
    %v52 = vld [vmem:[%s2 + $0x58] sm:$0xff]
    %v53 = vld [vmem:[%s2 + $0x60] sm:$0xff]
    %v54 = vld [vmem:[%s2 + $0x68] sm:$0xff]
    %v55 = vld [vmem:[%s2 + $0x70] sm:$0xff]
    %v56 = vld [vmem:[%s2 + $0x78] sm:$0xff]
    %v57 = vlaneseq
    %v58 = vand.u32 %v57, 127
    %v59 = vld [vmem:[%s0] sm:$0xff]
    %60 = vset.pattern.permute.xlu0 0
    %61 = vperm.xlu0 %60, %v59
    %v62 = vpop.permute.xlu0 %61
    %vm63 = vcmp.eq.s32.totalorder %v62, %v58
    %v64 = vsel %vm63, 1, 0
    %v65 = vcvt.s32.f32 %v64
    %66 = vmatprep.subr.mxu0 0.0
    %67 = vmatpush1.msra.mxu0 %v41
    %68 = vmatprep.subr.mxu0 0.0
    %69 = vmatpush1.msra.mxu0 %v42
    %70 = vmatprep.subr.mxu0 0.0
    %71 = vmatpush1.msra.mxu0 %v43
    %72 = vmatprep.subr.mxu0 0.0
    %73 = vmatpush1.msra.mxu0 %v44
    %74 = vmatprep.subr.mxu0 0.0
    %75 = vmatpush1.msra.mxu0 %v45
    %76 = vmatprep.subr.mxu0 0.0
    %77 = vmatpush1.msra.mxu0 %v46
    %78 = vmatprep.subr.mxu0 0.0
    %79 = vmatpush1.msra.mxu0 %v47
    %80 = vmatprep.subr.mxu0 0.0
    %81 = vmatpush1.msra.mxu0 %v48
    %82 = vmatprep.subr.mxu0 0.0
    %83 = vmatpush1.msra.mxu0 %v49
    %84 = vmatprep.subr.mxu0 0.0
    %85 = vmatpush1.msra.mxu0 %v50
    %86 = vmatprep.subr.mxu0 0.0
    %87 = vmatpush1.msra.mxu0 %v51
    %88 = vmatprep.subr.mxu0 0.0
    %89 = vmatpush1.msra.mxu0 %v52
    %90 = vmatprep.subr.mxu0 0.0
    %91 = vmatpush1.msra.mxu0 %v53
    %92 = vmatprep.subr.mxu0 0.0
    %93 = vmatpush1.msra.mxu0 %v54
    %94 = vmatprep.subr.mxu0 0.0
    %95 = vmatpush1.msra.mxu0 %v55
    %96 = vmatprep.subr.mxu0 0.0
    %97 = vmatpush1.msra.mxu0 %v56
    %98 = vmatprep.subr.mxu0 0.0
    %99 = vmatpush1.msra.mxu0 0.0
    %100 = vmatprep.subr.mxu0 0.0
    %101 = vmatpush1.msra.mxu0 0.0
    %102 = vmatprep.subr.mxu0 0.0
    %103 = vmatpush1.msra.mxu0 0.0
    %104 = vmatprep.subr.mxu0 0.0
    %105 = vmatpush1.msra.mxu0 0.0
    %106 = vmatprep.subr.mxu0 0.0
    %107 = vmatpush1.msra.mxu0 0.0
    %108 = vmatprep.subr.mxu0 0.0
    %109 = vmatpush1.msra.mxu0 0.0
    %110 = vmatprep.subr.mxu0 0.0
    %111 = vmatpush1.msra.mxu0 0.0
    %112 = vmatprep.subr.mxu0 0.0
    %113 = vmatpush1.msra.mxu0 0.0
    %114 = vmatprep.subr.mxu0 0.0
    %115 = vmatpush1.msra.mxu0 0.0
    %116 = vmatprep.subr.mxu0 0.0
    %117 = vmatpush1.msra.mxu0 0.0
    %118 = vmatprep.subr.mxu0 0.0
    %119 = vmatpush1.msra.mxu0 0.0
    %120 = vmatprep.subr.mxu0 0.0
    %121 = vmatpush1.msra.mxu0 0.0
    %122 = vmatprep.subr.mxu0 0.0
    %123 = vmatpush1.msra.mxu0 0.0
    %124 = vmatprep.subr.mxu0 0.0
    %125 = vmatpush1.msra.mxu0 0.0
    %126 = vmatprep.subr.mxu0 0.0
    %127 = vmatpush1.msra.mxu0 0.0
    %128 = vmatprep.subr.mxu0 0.0
    %129 = vmatpush1.msra.mxu0 0.0
    %130 = vmatprep.mubr.f32.mxu0 0.0
    %131 = vmatmul.mubr.f32.gmra.mrb[0].mxu0 %v65
    %v132 = vpop.f32.mrb[0].mxu0
    %v133 = vadd.f32 0.0, %v132
    %v134 = vpop.f32.mrb[0].mxu0
    %135 = vdwg.mxu0
    %v136 = vld [vmem:[%s1] sm:$0xff]
    %v137 = vld [vmem:[%s1 + $0x8] sm:$0xff]
    %v138 = vld [vmem:[%s1 + $0x10] sm:$0xff]
    %v139 = vld [vmem:[%s1 + $0x18] sm:$0xff]
    %v140 = vld [vmem:[%s1 + $0x20] sm:$0xff]
    %v141 = vld [vmem:[%s1 + $0x28] sm:$0xff]
    %v142 = vld [vmem:[%s1 + $0x30] sm:$0xff]
    %v143 = vld [vmem:[%s1 + $0x38] sm:$0xff]
    %144 = vset.pattern.permute.xlu0 0
    %145 = vperm.xlu0 %144, %v136
    %v146 = vpop.permute.xlu0 %145
    %147 = vset.pattern.permute.xlu0 0
    %148 = vperm.xlu0 %147, %v137
    %v149 = vpop.permute.xlu0 %148
    %150 = vset.pattern.permute.xlu0 0
    %151 = vperm.xlu0 %150, %v138
    %v152 = vpop.permute.xlu0 %151
    %153 = vset.pattern.permute.xlu0 0
    %154 = vperm.xlu0 %153, %v139
    %v155 = vpop.permute.xlu0 %154
    %156 = vset.pattern.permute.xlu0 0
    %157 = vperm.xlu0 %156, %v140
    %v158 = vpop.permute.xlu0 %157
    %159 = vset.pattern.permute.xlu0 0
    %160 = vperm.xlu0 %159, %v141
    %v161 = vpop.permute.xlu0 %160
    %162 = vset.pattern.permute.xlu0 0
    %163 = vperm.xlu0 %162, %v142
    %v164 = vpop.permute.xlu0 %163
    %165 = vset.pattern.permute.xlu0 0
    %166 = vperm.xlu0 %165, %v143
    %v167 = vpop.permute.xlu0 %166
    %vm168 = vcmp.eq.s32.totalorder %v146, %v58
    %vm169 = vcmp.eq.s32.totalorder %v149, %v58
    %vm170 = vcmp.eq.s32.totalorder %v152, %v58
    %vm171 = vcmp.eq.s32.totalorder %v155, %v58
    %vm172 = vcmp.eq.s32.totalorder %v158, %v58
    %vm173 = vcmp.eq.s32.totalorder %v161, %v58
    %vm174 = vcmp.eq.s32.totalorder %v164, %v58
    %vm175 = vcmp.eq.s32.totalorder %v167, %v58
    %v176 = vsel %vm168, 1, 0
    %v177 = vsel %vm169, 1, 0
    %v178 = vsel %vm170, 1, 0
    %v179 = vsel %vm171, 1, 0
    %v180 = vsel %vm172, 1, 0
    %v181 = vsel %vm173, 1, 0
    %v182 = vsel %vm174, 1, 0
    %v183 = vsel %vm175, 1, 0
    %v184 = vcvt.s32.f32 %v176
    %v185 = vcvt.s32.f32 %v177
    %v186 = vcvt.s32.f32 %v178
    %v187 = vcvt.s32.f32 %v179
    %v188 = vcvt.s32.f32 %v180
    %v189 = vcvt.s32.f32 %v181
    %v190 = vcvt.s32.f32 %v182
    %v191 = vcvt.s32.f32 %v183
    %192 = vmatprep.subr.mxu0 0.0
    %193 = vmatpush1.msra.mxu0 %v41
    %194 = vmatprep.subr.mxu0 0.0
    %195 = vmatpush1.msra.mxu0 %v42
    %196 = vmatprep.subr.mxu0 0.0
    %197 = vmatpush1.msra.mxu0 %v43
    %198 = vmatprep.subr.mxu0 0.0
    %199 = vmatpush1.msra.mxu0 %v44
    %200 = vmatprep.subr.mxu0 0.0
    %201 = vmatpush1.msra.mxu0 %v45
    %202 = vmatprep.subr.mxu0 0.0
    %203 = vmatpush1.msra.mxu0 %v46
    %204 = vmatprep.subr.mxu0 0.0
    %205 = vmatpush1.msra.mxu0 %v47
    %206 = vmatprep.subr.mxu0 0.0
    %207 = vmatpush1.msra.mxu0 %v48
    %208 = vmatprep.subr.mxu0 0.0
    %209 = vmatpush1.msra.mxu0 %v49
    %210 = vmatprep.subr.mxu0 0.0
    %211 = vmatpush1.msra.mxu0 %v50
    %212 = vmatprep.subr.mxu0 0.0
    %213 = vmatpush1.msra.mxu0 %v51
    %214 = vmatprep.subr.mxu0 0.0
    %215 = vmatpush1.msra.mxu0 %v52
    %216 = vmatprep.subr.mxu0 0.0
    %217 = vmatpush1.msra.mxu0 %v53
    %218 = vmatprep.subr.mxu0 0.0
    %219 = vmatpush1.msra.mxu0 %v54
    %220 = vmatprep.subr.mxu0 0.0
    %221 = vmatpush1.msra.mxu0 %v55
    %222 = vmatprep.subr.mxu0 0.0
    %223 = vmatpush1.msra.mxu0 %v56
    %224 = vmatprep.subr.mxu0 0.0
    %225 = vmatpush1.msra.mxu0 0.0
    %226 = vmatprep.subr.mxu0 0.0
    %227 = vmatpush1.msra.mxu0 0.0
    %228 = vmatprep.subr.mxu0 0.0
    %229 = vmatpush1.msra.mxu0 0.0
    %230 = vmatprep.subr.mxu0 0.0
    %231 = vmatpush1.msra.mxu0 0.0
    %232 = vmatprep.subr.mxu0 0.0
    %233 = vmatpush1.msra.mxu0 0.0
    %234 = vmatprep.subr.mxu0 0.0
    %235 = vmatpush1.msra.mxu0 0.0
    %236 = vmatprep.subr.mxu0 0.0
    %237 = vmatpush1.msra.mxu0 0.0
    %238 = vmatprep.subr.mxu0 0.0
    %239 = vmatpush1.msra.mxu0 0.0
    %240 = vmatprep.subr.mxu0 0.0
    %241 = vmatpush1.msra.mxu0 0.0
    %242 = vmatprep.subr.mxu0 0.0
    %243 = vmatpush1.msra.mxu0 0.0
    %244 = vmatprep.subr.mxu0 0.0
    %245 = vmatpush1.msra.mxu0 0.0
    %246 = vmatprep.subr.mxu0 0.0
    %247 = vmatpush1.msra.mxu0 0.0
    %248 = vmatprep.subr.mxu0 0.0
    %249 = vmatpush1.msra.mxu0 0.0
    %250 = vmatprep.subr.mxu0 0.0
    %251 = vmatpush1.msra.mxu0 0.0
    %252 = vmatprep.subr.mxu0 0.0
    %253 = vmatpush1.msra.mxu0 0.0
    %254 = vmatprep.subr.mxu0 0.0
    %255 = vmatpush1.msra.mxu0 0.0
    %256 = vmatprep.mubr.f32.mxu0 0.0
    %257 = vmatmul.mubr.f32.gmra.mrb[0].mxu0 %v184
    %v258 = vpop.f32.mrb[0].mxu0
    %v259 = vadd.f32 0.0, %v258
    %v260 = vpop.f32.mrb[0].mxu0
    %261 = vmatprep.mubr.f32.mxu0 0.0
    %262 = vmatmul.mubr.f32.gmra.mrb[0].mxu0 %v185
    %v263 = vpop.f32.mrb[0].mxu0
    %v264 = vadd.f32 0.0, %v263
    %v265 = vpop.f32.mrb[0].mxu0
    %266 = vmatprep.mubr.f32.mxu0 0.0
    %267 = vmatmul.mubr.f32.gmra.mrb[0].mxu0 %v186
    %v268 = vpop.f32.mrb[0].mxu0
    %v269 = vadd.f32 0.0, %v268
    %v270 = vpop.f32.mrb[0].mxu0
    %271 = vmatprep.mubr.f32.mxu0 0.0
    %272 = vmatmul.mubr.f32.gmra.mrb[0].mxu0 %v187
    %v273 = vpop.f32.mrb[0].mxu0
    %v274 = vadd.f32 0.0, %v273
    %v275 = vpop.f32.mrb[0].mxu0
    %276 = vmatprep.mubr.f32.mxu0 0.0
    %277 = vmatmul.mubr.f32.gmra.mrb[0].mxu0 %v188
    %v278 = vpop.f32.mrb[0].mxu0
    %v279 = vadd.f32 0.0, %v278
    %v280 = vpop.f32.mrb[0].mxu0
    %281 = vmatprep.mubr.f32.mxu0 0.0
    %282 = vmatmul.mubr.f32.gmra.mrb[0].mxu0 %v189
    %v283 = vpop.f32.mrb[0].mxu0
    %v284 = vadd.f32 0.0, %v283
    %v285 = vpop.f32.mrb[0].mxu0
    %286 = vmatprep.mubr.f32.mxu0 0.0
    %287 = vmatmul.mubr.f32.gmra.mrb[0].mxu0 %v190
    %v288 = vpop.f32.mrb[0].mxu0
    %v289 = vadd.f32 0.0, %v288
    %v290 = vpop.f32.mrb[0].mxu0
    %291 = vmatprep.mubr.f32.mxu0 0.0
    %292 = vmatmul.mubr.f32.gmra.mrb[0].mxu0 %v191
    %v293 = vpop.f32.mrb[0].mxu0
    %v294 = vadd.f32 0.0, %v293
    %v295 = vpop.f32.mrb[0].mxu0
    %296 = vdwg.mxu0
    %v297 = vpack.c.bf16 %v133, %v133
    %v298 = vld [vmem:[%s3] sm:$0xf]
    %v299 = vld [vmem:[%s3 + $0x4] sm:$0xf]
    %v300 = vld [vmem:[%s3 + $0x8] sm:$0xf]
    %v301 = vld [vmem:[%s3 + $0xc] sm:$0xf]
    %v302 = vld [vmem:[%s4] sm:$0x1]
    %v304 = vlaneseq
    %v305 = vshrl.u32 %v304, 7
    %v306 = vsub.s32 0, %v305
    %v307 = vrot.slane %v302, %v306
    %v313 = vunpack.c.l.b16 %v298
    %v314 = vunpack.c.l.b16 %v299
    %v315 = vunpack.c.l.b16 %v300
    %v316 = vunpack.c.l.b16 %v301
    %v317 = vpack.c.b16 %v314, %v313
    %v318 = vpack.c.b16 %v316, %v315
    %vm321 = vcmask 261120
    %v323 = vsel %vm321, %v297, 0
    %325 = vmatprep.subr.bf16.mxu0 0
    %326 = vmatpush1.bf16.msra.mxu0 %v317
    %327 = vmatprep.subr.bf16.mxu0 0
    %328 = vmatpush1.bf16.msra.mxu0 %v318
    %329 = vmatprep.subr.bf16.mxu0 0
    %330 = vmatpush1.bf16.msra.mxu0 0
    %331 = vmatprep.subr.bf16.mxu0 0
    %332 = vmatpush1.bf16.msra.mxu0 0
    %333 = vmatprep.subr.bf16.mxu0 0
    %334 = vmatpush1.bf16.msra.mxu0 0
    %335 = vmatprep.subr.bf16.mxu0 0
    %336 = vmatpush1.bf16.msra.mxu0 0
    %337 = vmatprep.subr.bf16.mxu0 0
    %338 = vmatpush1.bf16.msra.mxu0 0
    %339 = vmatprep.subr.bf16.mxu0 0
    %340 = vmatpush1.bf16.msra.mxu0 0
    %341 = vmatprep.subr.bf16.mxu0 0
    %342 = vmatpush1.bf16.msra.mxu0 0
    %343 = vmatprep.subr.bf16.mxu0 0
    %344 = vmatpush1.bf16.msra.mxu0 0
    %345 = vmatprep.subr.bf16.mxu0 0
    %346 = vmatpush1.bf16.msra.mxu0 0
    %347 = vmatprep.subr.bf16.mxu0 0
    %348 = vmatpush1.bf16.msra.mxu0 0
    %349 = vmatprep.subr.bf16.mxu0 0
    %350 = vmatpush1.bf16.msra.mxu0 0
    %351 = vmatprep.subr.bf16.mxu0 0
    %352 = vmatpush1.bf16.msra.mxu0 0
    %353 = vmatprep.subr.bf16.mxu0 0
    %354 = vmatpush1.bf16.msra.mxu0 0
    %355 = vmatprep.subr.bf16.mxu0 0
    %356 = vmatpush1.bf16.msra.mxu0 0
    %357 = vmatprep.mubr.bf16.mxu0 0
    %358 = vmatmul.mubr.bf16.gmra.mrb[0].mxu0 %v323
    %v359 = vpop.f32.mrb[0].mxu0
    %v360 = vadd.f32 %v307, %v359
    %v361 = vpop.f32.mrb[0].mxu0
    %v362 = vpop.f32.mrb[0].mxu0
    %v363 = vpop.f32.mrb[0].mxu0
    %364 = vdwg.mxu0
    %v365 = vpack.c.bf16 %v264, %v259
    %v366 = vpack.c.bf16 %v274, %v269
    %v367 = vpack.c.bf16 %v284, %v279
    %v368 = vpack.c.bf16 %v294, %v289
    %v369 = vld [vmem:[%s5] sm:$0xf]
    %v370 = vld [vmem:[%s5 + $0x4] sm:$0xf]
    %v371 = vld [vmem:[%s5 + $0x8] sm:$0xf]
    %v372 = vld [vmem:[%s5 + $0xc] sm:$0xf]
    %v373 = vld [vmem:[%s7] sm:$0x1]
    %v375 = vlaneseq
    %v376 = vshrl.u32 %v375, 7
    %v377 = vsub.s32 0, %v376
    %v378 = vrot.slane %v373, %v377
    %v384 = vunpack.c.l.b16 %v369
    %v385 = vunpack.c.l.b16 %v370
    %v386 = vunpack.c.l.b16 %v371
    %v387 = vunpack.c.l.b16 %v372
    %v388 = vpack.c.b16 %v385, %v384
    %v389 = vpack.c.b16 %v387, %v386
    %v393 = vsel %vm321, %v365, 0
    %v396 = vsel %vm321, %v366, 0
    %v399 = vsel %vm321, %v367, 0
    %v402 = vsel %vm321, %v368, 0
    %404 = vmatprep.subr.bf16.mxu0 0
    %405 = vmatpush1.bf16.msra.mxu0 %v388
    %406 = vmatprep.subr.bf16.mxu0 0
    %407 = vmatpush1.bf16.msra.mxu0 %v389
    %408 = vmatprep.subr.bf16.mxu0 0
    %409 = vmatpush1.bf16.msra.mxu0 0
    %410 = vmatprep.subr.bf16.mxu0 0
    %411 = vmatpush1.bf16.msra.mxu0 0
    %412 = vmatprep.subr.bf16.mxu0 0
    %413 = vmatpush1.bf16.msra.mxu0 0
    %414 = vmatprep.subr.bf16.mxu0 0
    %415 = vmatpush1.bf16.msra.mxu0 0
    %416 = vmatprep.subr.bf16.mxu0 0
    %417 = vmatpush1.bf16.msra.mxu0 0
    %418 = vmatprep.subr.bf16.mxu0 0
    %419 = vmatpush1.bf16.msra.mxu0 0
    %420 = vmatprep.subr.bf16.mxu0 0
    %421 = vmatpush1.bf16.msra.mxu0 0
    %422 = vmatprep.subr.bf16.mxu0 0
    %423 = vmatpush1.bf16.msra.mxu0 0
    %424 = vmatprep.subr.bf16.mxu0 0
    %425 = vmatpush1.bf16.msra.mxu0 0
    %426 = vmatprep.subr.bf16.mxu0 0
    %427 = vmatpush1.bf16.msra.mxu0 0
    %428 = vmatprep.subr.bf16.mxu0 0
    %429 = vmatpush1.bf16.msra.mxu0 0
    %430 = vmatprep.subr.bf16.mxu0 0
    %431 = vmatpush1.bf16.msra.mxu0 0
    %432 = vmatprep.subr.bf16.mxu0 0
    %433 = vmatpush1.bf16.msra.mxu0 0
    %434 = vmatprep.subr.bf16.mxu0 0
    %435 = vmatpush1.bf16.msra.mxu0 0
    %436 = vmatprep.mubr.bf16.mxu0 0
    %437 = vmatmul.mubr.bf16.gmra.mrb[0].mxu0 %v393
    %v438 = vpop.f32.mrb[0].mxu0
    %v439 = vadd.f32 %v378, %v438
    %v440 = vpop.f32.mrb[0].mxu0
    %v441 = vpop.f32.mrb[0].mxu0
    %v442 = vadd.f32 %v378, %v441
    %v443 = vpop.f32.mrb[0].mxu0
    %444 = vmatprep.mubr.bf16.mxu0 0
    %445 = vmatmul.mubr.bf16.gmra.mrb[0].mxu0 %v396
    %v446 = vpop.f32.mrb[0].mxu0
    %v447 = vadd.f32 %v378, %v446
    %v448 = vpop.f32.mrb[0].mxu0
    %v449 = vpop.f32.mrb[0].mxu0
    %v450 = vadd.f32 %v378, %v449
    %v451 = vpop.f32.mrb[0].mxu0
    %452 = vmatprep.mubr.bf16.mxu0 0
    %453 = vmatmul.mubr.bf16.gmra.mrb[0].mxu0 %v399
    %v454 = vpop.f32.mrb[0].mxu0
    %v455 = vadd.f32 %v378, %v454
    %v456 = vpop.f32.mrb[0].mxu0
    %v457 = vpop.f32.mrb[0].mxu0
    %v458 = vadd.f32 %v378, %v457
    %v459 = vpop.f32.mrb[0].mxu0
    %460 = vmatprep.mubr.bf16.mxu0 0
    %461 = vmatmul.mubr.bf16.gmra.mrb[0].mxu0 %v402
    %v462 = vpop.f32.mrb[0].mxu0
    %v463 = vadd.f32 %v378, %v462
    %v464 = vpop.f32.mrb[0].mxu0
    %v465 = vpop.f32.mrb[0].mxu0
    %v466 = vadd.f32 %v378, %v465
    %v467 = vpop.f32.mrb[0].mxu0
    %468 = vdwg.mxu0
    %v469 = vld [vmem:[%s6] sm:$0xf]
    %v470 = vld [vmem:[%s6 + $0x4] sm:$0xf]
    %v471 = vld [vmem:[%s6 + $0x8] sm:$0xf]
    %v472 = vld [vmem:[%s6 + $0xc] sm:$0xf]
    %v473 = vld [vmem:[%s8] sm:$0xf]
    %v474 = vld [vmem:[%s8 + $0x4] sm:$0xf]
    %v475 = vld [vmem:[%s8 + $0x8] sm:$0xf]
    %v476 = vld [vmem:[%s8 + $0xc] sm:$0xf]
    %v477 = vld [vmem:[%s9] sm:$0x1]
    %vm478 = vcmp.ge.s32.totalorder %v58, 64
    %vm479 = vcmp.lt.s32.totalorder %v58, 96
    %vm480 = vmand %vm478, %vm479
    %v485 = vunpack.c.l.b16 %v469
    %v486 = vunpack.c.l.b16 %v470
    %v487 = vunpack.c.l.b16 %v471
    %v488 = vunpack.c.l.b16 %v472
    %v489 = vpack.c.b16 %v486, %v485
    %v490 = vpack.c.b16 %v488, %v487
    %v494 = vsel %vm321, 0, 0
    %496 = vmatprep.subr.bf16.mxu0 0
    %497 = vmatpush1.bf16.msra.mxu0 %v489
    %498 = vmatprep.subr.bf16.mxu0 0
    %499 = vmatpush1.bf16.msra.mxu0 %v490
    %500 = vmatprep.subr.bf16.mxu0 0
    %501 = vmatpush1.bf16.msra.mxu0 0
    %502 = vmatprep.subr.bf16.mxu0 0
    %503 = vmatpush1.bf16.msra.mxu0 0
    %504 = vmatprep.subr.bf16.mxu0 0
    %505 = vmatpush1.bf16.msra.mxu0 0
    %506 = vmatprep.subr.bf16.mxu0 0
    %507 = vmatpush1.bf16.msra.mxu0 0
    %508 = vmatprep.subr.bf16.mxu0 0
    %509 = vmatpush1.bf16.msra.mxu0 0
    %510 = vmatprep.subr.bf16.mxu0 0
    %511 = vmatpush1.bf16.msra.mxu0 0
    %512 = vmatprep.subr.bf16.mxu0 0
    %513 = vmatpush1.bf16.msra.mxu0 0
    %514 = vmatprep.subr.bf16.mxu0 0
    %515 = vmatpush1.bf16.msra.mxu0 0
    %516 = vmatprep.subr.bf16.mxu0 0
    %517 = vmatpush1.bf16.msra.mxu0 0
    %518 = vmatprep.subr.bf16.mxu0 0
    %519 = vmatpush1.bf16.msra.mxu0 0
    %520 = vmatprep.subr.bf16.mxu0 0
    %521 = vmatpush1.bf16.msra.mxu0 0
    %522 = vmatprep.subr.bf16.mxu0 0
    %523 = vmatpush1.bf16.msra.mxu0 0
    %524 = vmatprep.subr.bf16.mxu0 0
    %525 = vmatpush1.bf16.msra.mxu0 0
    %526 = vmatprep.subr.bf16.mxu0 0
    %527 = vmatpush1.bf16.msra.mxu0 0
    %528 = vmatprep.mubr.bf16.mxu0 0
    %529 = vmatmul.mubr.bf16.gmra.mrb[0].mxu0 %v494
    %v530 = vpop.f32.mrb[0].mxu0
    %v531 = vadd.f32 0.0, %v530
    %v532 = vpop.f32.mrb[0].mxu0
    %v533 = vpop.f32.mrb[0].mxu0
    %v534 = vpop.f32.mrb[0].mxu0
    %535 = vdwg.mxu0
    %v536 = vadd.f32 %v439, %v531
    %v537 = vmul.f32 %v536, 2.0
    %v538 = vsel %vm480, %v537, %v536
    %v539 = vxor.u32 %v538, 2147483648
    %v540 = vmul.f32 %v539, 1.442695
    %v541 = vpow.pop %v540
    %v542 = vadd.f32 %v541, 1.0
    %v543 = vrcp.pop %v542
    %v544 = vmul.f32 1.0, %v543
    %v545 = vmul.f32 %v544, 2.0
    %v546 = vsub.f32 %v545, 1.0
    %v547 = vsel %vm480, %v546, %v544
    %549 = vrot.lane.b32.xlu0 %v360, 32
    %v550 = vpop.permute.xlu0 %549
    %v552 = vmul.f32 %v547, %v550
    %554 = vrot.lane.b32.xlu0 %v547, 64
    %v555 = vpop.permute.xlu0 %554
    %v557 = vmul.f32 %v547, %v555
    %559 = vrot.lane.b32.xlu0 %v557, 32
    %v560 = vpop.permute.xlu0 %559
    %v562 = vadd.f32 %v552, %v560
    %v563 = vtanh.pop %v562
    %565 = vrot.lane.b32.xlu0 %v563, 64
    %v566 = vpop.permute.xlu0 %565
    %v568 = vmul.f32 %v547, %v566
    %v569 = vpack.c.bf16 %v568, %v568
    %v571 = vlaneseq
    %v572 = vshrl.u32 %v571, 7
    %v573 = vsub.s32 0, %v572
    %v574 = vrot.slane %v477, %v573
    %577 = vrot.lane.b32.xlu0 %v569, 32
    %v578 = vpop.permute.xlu0 %577
    %v583 = vunpack.c.l.b16 %v473
    %v584 = vunpack.c.l.b16 %v474
    %v585 = vunpack.c.l.b16 %v475
    %v586 = vunpack.c.l.b16 %v476
    %v587 = vpack.c.b16 %v584, %v583
    %v588 = vpack.c.b16 %v586, %v585
    %v592 = vsel %vm321, %v578, 0
    %594 = vmatprep.subr.bf16.mxu0 0
    %595 = vmatpush1.bf16.msra.mxu0 %v587
    %596 = vmatprep.subr.bf16.mxu0 0
    %597 = vmatpush1.bf16.msra.mxu0 %v588
    %598 = vmatprep.subr.bf16.mxu0 0
    %599 = vmatpush1.bf16.msra.mxu0 0
    %600 = vmatprep.subr.bf16.mxu0 0
    %601 = vmatpush1.bf16.msra.mxu0 0
    %602 = vmatprep.subr.bf16.mxu0 0
    %603 = vmatpush1.bf16.msra.mxu0 0
    %604 = vmatprep.subr.bf16.mxu0 0
    %605 = vmatpush1.bf16.msra.mxu0 0
    %606 = vmatprep.subr.bf16.mxu0 0
    %607 = vmatpush1.bf16.msra.mxu0 0
    %608 = vmatprep.subr.bf16.mxu0 0
    %609 = vmatpush1.bf16.msra.mxu0 0
    %610 = vmatprep.subr.bf16.mxu0 0
    %611 = vmatpush1.bf16.msra.mxu0 0
    %612 = vmatprep.subr.bf16.mxu0 0
    %613 = vmatpush1.bf16.msra.mxu0 0
    %614 = vmatprep.subr.bf16.mxu0 0
    %615 = vmatpush1.bf16.msra.mxu0 0
    %616 = vmatprep.subr.bf16.mxu0 0
    %617 = vmatpush1.bf16.msra.mxu0 0
    %618 = vmatprep.subr.bf16.mxu0 0
    %619 = vmatpush1.bf16.msra.mxu0 0
    %620 = vmatprep.subr.bf16.mxu0 0
    %621 = vmatpush1.bf16.msra.mxu0 0
    %622 = vmatprep.subr.bf16.mxu0 0
    %623 = vmatpush1.bf16.msra.mxu0 0
    %624 = vmatprep.subr.bf16.mxu0 0
    %625 = vmatpush1.bf16.msra.mxu0 0
    %626 = vmatprep.mubr.bf16.mxu0 0
    %627 = vmatmul.mubr.bf16.gmra.mrb[0].mxu0 %v592
    %v628 = vpop.f32.mrb[0].mxu0
    %v629 = vadd.f32 %v574, %v628
    %v630 = vpop.f32.mrb[0].mxu0
    %v631 = vpop.f32.mrb[0].mxu0
    %v632 = vpop.f32.mrb[0].mxu0
    %633 = vdwg.mxu0
    %634 = vst [vmem:[#allocation2] sm:$0xff] %v629
    %635 = vmatprep.subr.bf16.mxu0 0
    %636 = vmatpush1.bf16.msra.mxu0 %v489
    %637 = vmatprep.subr.bf16.mxu0 0
    %638 = vmatpush1.bf16.msra.mxu0 %v490
    %639 = vmatprep.subr.bf16.mxu0 0
    %640 = vmatpush1.bf16.msra.mxu0 0
    %641 = vmatprep.subr.bf16.mxu0 0
    %642 = vmatpush1.bf16.msra.mxu0 0
    %643 = vmatprep.subr.bf16.mxu0 0
    %644 = vmatpush1.bf16.msra.mxu0 0
    %645 = vmatprep.subr.bf16.mxu0 0
    %646 = vmatpush1.bf16.msra.mxu0 0
    %647 = vmatprep.subr.bf16.mxu0 0
    %648 = vmatpush1.bf16.msra.mxu0 0
    %649 = vmatprep.subr.bf16.mxu0 0
    %650 = vmatpush1.bf16.msra.mxu0 0
    %651 = vmatprep.subr.bf16.mxu0 0
    %652 = vmatpush1.bf16.msra.mxu0 0
    %653 = vmatprep.subr.bf16.mxu0 0
    %654 = vmatpush1.bf16.msra.mxu0 0
    %655 = vmatprep.subr.bf16.mxu0 0
    %656 = vmatpush1.bf16.msra.mxu0 0
    %657 = vmatprep.subr.bf16.mxu0 0
    %658 = vmatpush1.bf16.msra.mxu0 0
    %659 = vmatprep.subr.bf16.mxu0 0
    %660 = vmatpush1.bf16.msra.mxu0 0
    %661 = vmatprep.subr.bf16.mxu0 0
    %662 = vmatpush1.bf16.msra.mxu0 0
    %663 = vmatprep.subr.bf16.mxu0 0
    %664 = vmatpush1.bf16.msra.mxu0 0
    %665 = vmatprep.subr.bf16.mxu0 0
    %666 = vmatpush1.bf16.msra.mxu0 0
    %667 = vmatprep.mubr.bf16.mxu0 0
    %668 = vmatmul.mubr.bf16.gmra.mrb[0].mxu0 %v592
    %v669 = vpop.f32.mrb[0].mxu0
    %v670 = vadd.f32 0.0, %v669
    %v671 = vpop.f32.mrb[0].mxu0
    %v672 = vpop.f32.mrb[0].mxu0
    %v673 = vpop.f32.mrb[0].mxu0
    %674 = vdwg.mxu0
    %v675 = vadd.f32 %v442, %v670
    %v676 = vmul.f32 %v675, 2.0
    %v677 = vsel %vm480, %v676, %v675
    %v678 = vxor.u32 %v677, 2147483648
    %v679 = vmul.f32 %v678, 1.442695
    %v680 = vpow.pop %v679
    %v681 = vadd.f32 %v680, 1.0
    %v682 = vrcp.pop %v681
    %v683 = vmul.f32 1.0, %v682
    %v684 = vmul.f32 %v683, 2.0
    %v685 = vsub.f32 %v684, 1.0
    %v686 = vsel %vm480, %v685, %v683
    %v687 = vmul.f32 %v686, %v562
    %689 = vrot.lane.b32.xlu0 %v686, 64
    %v690 = vpop.permute.xlu0 %689
    %v692 = vmul.f32 %v686, %v690
    %694 = vrot.lane.b32.xlu0 %v692, 32
    %v695 = vpop.permute.xlu0 %694
    %v697 = vadd.f32 %v687, %v695
    %v698 = vtanh.pop %v697
    %700 = vrot.lane.b32.xlu0 %v698, 64
    %v701 = vpop.permute.xlu0 %700
    %v703 = vmul.f32 %v686, %v701
    %v704 = vpack.c.bf16 %v703, %v703
    %706 = vrot.lane.b32.xlu0 %v704, 32
    %v707 = vpop.permute.xlu0 %706
    %v709 = vsel %vm321, %v707, 0
    %711 = vmatprep.subr.bf16.mxu0 0
    %712 = vmatpush1.bf16.msra.mxu0 %v587
    %713 = vmatprep.subr.bf16.mxu0 0
    %714 = vmatpush1.bf16.msra.mxu0 %v588
    %715 = vmatprep.subr.bf16.mxu0 0
    %716 = vmatpush1.bf16.msra.mxu0 0
    %717 = vmatprep.subr.bf16.mxu0 0
    %718 = vmatpush1.bf16.msra.mxu0 0
    %719 = vmatprep.subr.bf16.mxu0 0
    %720 = vmatpush1.bf16.msra.mxu0 0
    %721 = vmatprep.subr.bf16.mxu0 0
    %722 = vmatpush1.bf16.msra.mxu0 0
    %723 = vmatprep.subr.bf16.mxu0 0
    %724 = vmatpush1.bf16.msra.mxu0 0
    %725 = vmatprep.subr.bf16.mxu0 0
    %726 = vmatpush1.bf16.msra.mxu0 0
    %727 = vmatprep.subr.bf16.mxu0 0
    %728 = vmatpush1.bf16.msra.mxu0 0
    %729 = vmatprep.subr.bf16.mxu0 0
    %730 = vmatpush1.bf16.msra.mxu0 0
    %731 = vmatprep.subr.bf16.mxu0 0
    %732 = vmatpush1.bf16.msra.mxu0 0
    %733 = vmatprep.subr.bf16.mxu0 0
    %734 = vmatpush1.bf16.msra.mxu0 0
    %735 = vmatprep.subr.bf16.mxu0 0
    %736 = vmatpush1.bf16.msra.mxu0 0
    %737 = vmatprep.subr.bf16.mxu0 0
    %738 = vmatpush1.bf16.msra.mxu0 0
    %739 = vmatprep.subr.bf16.mxu0 0
    %740 = vmatpush1.bf16.msra.mxu0 0
    %741 = vmatprep.subr.bf16.mxu0 0
    %742 = vmatpush1.bf16.msra.mxu0 0
    %743 = vmatprep.mubr.bf16.mxu0 0
    %744 = vmatmul.mubr.bf16.gmra.mrb[0].mxu0 %v709
    %v745 = vpop.f32.mrb[0].mxu0
    %v746 = vadd.f32 %v574, %v745
    %v747 = vpop.f32.mrb[0].mxu0
    %v748 = vpop.f32.mrb[0].mxu0
    %v749 = vpop.f32.mrb[0].mxu0
    %750 = vdwg.mxu0
    %751 = vst [vmem:[#allocation2 + $0x8] sm:$0xff] %v746
    %752 = vmatprep.subr.bf16.mxu0 0
    %753 = vmatpush1.bf16.msra.mxu0 %v489
    %754 = vmatprep.subr.bf16.mxu0 0
    %755 = vmatpush1.bf16.msra.mxu0 %v490
    %756 = vmatprep.subr.bf16.mxu0 0
    %757 = vmatpush1.bf16.msra.mxu0 0
    %758 = vmatprep.subr.bf16.mxu0 0
    %759 = vmatpush1.bf16.msra.mxu0 0
    %760 = vmatprep.subr.bf16.mxu0 0
    %761 = vmatpush1.bf16.msra.mxu0 0
    %762 = vmatprep.subr.bf16.mxu0 0
    %763 = vmatpush1.bf16.msra.mxu0 0
    %764 = vmatprep.subr.bf16.mxu0 0
    %765 = vmatpush1.bf16.msra.mxu0 0
    %766 = vmatprep.subr.bf16.mxu0 0
    %767 = vmatpush1.bf16.msra.mxu0 0
    %768 = vmatprep.subr.bf16.mxu0 0
    %769 = vmatpush1.bf16.msra.mxu0 0
    %770 = vmatprep.subr.bf16.mxu0 0
    %771 = vmatpush1.bf16.msra.mxu0 0
    %772 = vmatprep.subr.bf16.mxu0 0
    %773 = vmatpush1.bf16.msra.mxu0 0
    %774 = vmatprep.subr.bf16.mxu0 0
    %775 = vmatpush1.bf16.msra.mxu0 0
    %776 = vmatprep.subr.bf16.mxu0 0
    %777 = vmatpush1.bf16.msra.mxu0 0
    %778 = vmatprep.subr.bf16.mxu0 0
    %779 = vmatpush1.bf16.msra.mxu0 0
    %780 = vmatprep.subr.bf16.mxu0 0
    %781 = vmatpush1.bf16.msra.mxu0 0
    %782 = vmatprep.subr.bf16.mxu0 0
    %783 = vmatpush1.bf16.msra.mxu0 0
    %784 = vmatprep.mubr.bf16.mxu0 0
    %785 = vmatmul.mubr.bf16.gmra.mrb[0].mxu0 %v709
    %v786 = vpop.f32.mrb[0].mxu0
    %v787 = vadd.f32 0.0, %v786
    %v788 = vpop.f32.mrb[0].mxu0
    %v789 = vpop.f32.mrb[0].mxu0
    %v790 = vpop.f32.mrb[0].mxu0
    %791 = vdwg.mxu0
    %v792 = vadd.f32 %v447, %v787
    %v793 = vmul.f32 %v792, 2.0
    %v794 = vsel %vm480, %v793, %v792
    %v795 = vxor.u32 %v794, 2147483648
    %v796 = vmul.f32 %v795, 1.442695
    %v797 = vpow.pop %v796
    %v798 = vadd.f32 %v797, 1.0
    %v799 = vrcp.pop %v798
    %v800 = vmul.f32 1.0, %v799
    %v801 = vmul.f32 %v800, 2.0
    %v802 = vsub.f32 %v801, 1.0
    %v803 = vsel %vm480, %v802, %v800
    %v804 = vmul.f32 %v803, %v697
    %806 = vrot.lane.b32.xlu0 %v803, 64
    %v807 = vpop.permute.xlu0 %806
    %v809 = vmul.f32 %v803, %v807
    %811 = vrot.lane.b32.xlu0 %v809, 32
    %v812 = vpop.permute.xlu0 %811
    %v814 = vadd.f32 %v804, %v812
    %v815 = vtanh.pop %v814
    %817 = vrot.lane.b32.xlu0 %v815, 64
    %v818 = vpop.permute.xlu0 %817
    %v820 = vmul.f32 %v803, %v818
    %v821 = vpack.c.bf16 %v820, %v820
    %823 = vrot.lane.b32.xlu0 %v821, 32
    %v824 = vpop.permute.xlu0 %823
    %v826 = vsel %vm321, %v824, 0
    %828 = vmatprep.subr.bf16.mxu0 0
    %829 = vmatpush1.bf16.msra.mxu0 %v587
    %830 = vmatprep.subr.bf16.mxu0 0
    %831 = vmatpush1.bf16.msra.mxu0 %v588
    %832 = vmatprep.subr.bf16.mxu0 0
    %833 = vmatpush1.bf16.msra.mxu0 0
    %834 = vmatprep.subr.bf16.mxu0 0
    %835 = vmatpush1.bf16.msra.mxu0 0
    %836 = vmatprep.subr.bf16.mxu0 0
    %837 = vmatpush1.bf16.msra.mxu0 0
    %838 = vmatprep.subr.bf16.mxu0 0
    %839 = vmatpush1.bf16.msra.mxu0 0
    %840 = vmatprep.subr.bf16.mxu0 0
    %841 = vmatpush1.bf16.msra.mxu0 0
    %842 = vmatprep.subr.bf16.mxu0 0
    %843 = vmatpush1.bf16.msra.mxu0 0
    %844 = vmatprep.subr.bf16.mxu0 0
    %845 = vmatpush1.bf16.msra.mxu0 0
    %846 = vmatprep.subr.bf16.mxu0 0
    %847 = vmatpush1.bf16.msra.mxu0 0
    %848 = vmatprep.subr.bf16.mxu0 0
    %849 = vmatpush1.bf16.msra.mxu0 0
    %850 = vmatprep.subr.bf16.mxu0 0
    %851 = vmatpush1.bf16.msra.mxu0 0
    %852 = vmatprep.subr.bf16.mxu0 0
    %853 = vmatpush1.bf16.msra.mxu0 0
    %854 = vmatprep.subr.bf16.mxu0 0
    %855 = vmatpush1.bf16.msra.mxu0 0
    %856 = vmatprep.subr.bf16.mxu0 0
    %857 = vmatpush1.bf16.msra.mxu0 0
    %858 = vmatprep.subr.bf16.mxu0 0
    %859 = vmatpush1.bf16.msra.mxu0 0
    %860 = vmatprep.mubr.bf16.mxu0 0
    %861 = vmatmul.mubr.bf16.gmra.mrb[0].mxu0 %v826
    %v862 = vpop.f32.mrb[0].mxu0
    %v863 = vadd.f32 %v574, %v862
    %v864 = vpop.f32.mrb[0].mxu0
    %v865 = vpop.f32.mrb[0].mxu0
    %v866 = vpop.f32.mrb[0].mxu0
    %867 = vdwg.mxu0
    %868 = vst [vmem:[#allocation2 + $0x10] sm:$0xff] %v863
    %869 = vmatprep.subr.bf16.mxu0 0
    %870 = vmatpush1.bf16.msra.mxu0 %v489
    %871 = vmatprep.subr.bf16.mxu0 0
    %872 = vmatpush1.bf16.msra.mxu0 %v490
    %873 = vmatprep.subr.bf16.mxu0 0
    %874 = vmatpush1.bf16.msra.mxu0 0
    %875 = vmatprep.subr.bf16.mxu0 0
    %876 = vmatpush1.bf16.msra.mxu0 0
    %877 = vmatprep.subr.bf16.mxu0 0
    %878 = vmatpush1.bf16.msra.mxu0 0
    %879 = vmatprep.subr.bf16.mxu0 0
    %880 = vmatpush1.bf16.msra.mxu0 0
    %881 = vmatprep.subr.bf16.mxu0 0
    %882 = vmatpush1.bf16.msra.mxu0 0
    %883 = vmatprep.subr.bf16.mxu0 0
    %884 = vmatpush1.bf16.msra.mxu0 0
    %885 = vmatprep.subr.bf16.mxu0 0
    %886 = vmatpush1.bf16.msra.mxu0 0
    %887 = vmatprep.subr.bf16.mxu0 0
    %888 = vmatpush1.bf16.msra.mxu0 0
    %889 = vmatprep.subr.bf16.mxu0 0
    %890 = vmatpush1.bf16.msra.mxu0 0
    %891 = vmatprep.subr.bf16.mxu0 0
    %892 = vmatpush1.bf16.msra.mxu0 0
    %893 = vmatprep.subr.bf16.mxu0 0
    %894 = vmatpush1.bf16.msra.mxu0 0
    %895 = vmatprep.subr.bf16.mxu0 0
    %896 = vmatpush1.bf16.msra.mxu0 0
    %897 = vmatprep.subr.bf16.mxu0 0
    %898 = vmatpush1.bf16.msra.mxu0 0
    %899 = vmatprep.subr.bf16.mxu0 0
    %900 = vmatpush1.bf16.msra.mxu0 0
    %901 = vmatprep.mubr.bf16.mxu0 0
    %902 = vmatmul.mubr.bf16.gmra.mrb[0].mxu0 %v826
    %v903 = vpop.f32.mrb[0].mxu0
    %v904 = vadd.f32 0.0, %v903
    %v905 = vpop.f32.mrb[0].mxu0
    %v906 = vpop.f32.mrb[0].mxu0
    %v907 = vpop.f32.mrb[0].mxu0
    %908 = vdwg.mxu0
    %v909 = vadd.f32 %v450, %v904
    %v910 = vmul.f32 %v909, 2.0
    %v911 = vsel %vm480, %v910, %v909
    %v912 = vxor.u32 %v911, 2147483648
    %v913 = vmul.f32 %v912, 1.442695
    %v914 = vpow.pop %v913
    %v915 = vadd.f32 %v914, 1.0
    %v916 = vrcp.pop %v915
    %v917 = vmul.f32 1.0, %v916
    %v918 = vmul.f32 %v917, 2.0
    %v919 = vsub.f32 %v918, 1.0
    %v920 = vsel %vm480, %v919, %v917
    %v921 = vmul.f32 %v920, %v814
    %923 = vrot.lane.b32.xlu0 %v920, 64
    %v924 = vpop.permute.xlu0 %923
    %v926 = vmul.f32 %v920, %v924
    %928 = vrot.lane.b32.xlu0 %v926, 32
    %v929 = vpop.permute.xlu0 %928
    %v931 = vadd.f32 %v921, %v929
    %v932 = vtanh.pop %v931
    %934 = vrot.lane.b32.xlu0 %v932, 64
    %v935 = vpop.permute.xlu0 %934
    %v937 = vmul.f32 %v920, %v935
    %v938 = vpack.c.bf16 %v937, %v937
    %940 = vrot.lane.b32.xlu0 %v938, 32
    %v941 = vpop.permute.xlu0 %940
    %v943 = vsel %vm321, %v941, 0
    %945 = vmatprep.subr.bf16.mxu0 0
    %946 = vmatpush1.bf16.msra.mxu0 %v587
    %947 = vmatprep.subr.bf16.mxu0 0
    %948 = vmatpush1.bf16.msra.mxu0 %v588
    %949 = vmatprep.subr.bf16.mxu0 0
    %950 = vmatpush1.bf16.msra.mxu0 0
    %951 = vmatprep.subr.bf16.mxu0 0
    %952 = vmatpush1.bf16.msra.mxu0 0
    %953 = vmatprep.subr.bf16.mxu0 0
    %954 = vmatpush1.bf16.msra.mxu0 0
    %955 = vmatprep.subr.bf16.mxu0 0
    %956 = vmatpush1.bf16.msra.mxu0 0
    %957 = vmatprep.subr.bf16.mxu0 0
    %958 = vmatpush1.bf16.msra.mxu0 0
    %959 = vmatprep.subr.bf16.mxu0 0
    %960 = vmatpush1.bf16.msra.mxu0 0
    %961 = vmatprep.subr.bf16.mxu0 0
    %962 = vmatpush1.bf16.msra.mxu0 0
    %963 = vmatprep.subr.bf16.mxu0 0
    %964 = vmatpush1.bf16.msra.mxu0 0
    %965 = vmatprep.subr.bf16.mxu0 0
    %966 = vmatpush1.bf16.msra.mxu0 0
    %967 = vmatprep.subr.bf16.mxu0 0
    %968 = vmatpush1.bf16.msra.mxu0 0
    %969 = vmatprep.subr.bf16.mxu0 0
    %970 = vmatpush1.bf16.msra.mxu0 0
    %971 = vmatprep.subr.bf16.mxu0 0
    %972 = vmatpush1.bf16.msra.mxu0 0
    %973 = vmatprep.subr.bf16.mxu0 0
    %974 = vmatpush1.bf16.msra.mxu0 0
    %975 = vmatprep.subr.bf16.mxu0 0
    %976 = vmatpush1.bf16.msra.mxu0 0
    %977 = vmatprep.mubr.bf16.mxu0 0
    %978 = vmatmul.mubr.bf16.gmra.mrb[0].mxu0 %v943
    %v979 = vpop.f32.mrb[0].mxu0
    %v980 = vadd.f32 %v574, %v979
    %v981 = vpop.f32.mrb[0].mxu0
    %v982 = vpop.f32.mrb[0].mxu0
    %v983 = vpop.f32.mrb[0].mxu0
    %984 = vdwg.mxu0
    %985 = vst [vmem:[#allocation2 + $0x18] sm:$0xff] %v980
    %986 = vmatprep.subr.bf16.mxu0 0
    %987 = vmatpush1.bf16.msra.mxu0 %v489
    %988 = vmatprep.subr.bf16.mxu0 0
    %989 = vmatpush1.bf16.msra.mxu0 %v490
    %990 = vmatprep.subr.bf16.mxu0 0
    %991 = vmatpush1.bf16.msra.mxu0 0
    %992 = vmatprep.subr.bf16.mxu0 0
    %993 = vmatpush1.bf16.msra.mxu0 0
    %994 = vmatprep.subr.bf16.mxu0 0
    %995 = vmatpush1.bf16.msra.mxu0 0
    %996 = vmatprep.subr.bf16.mxu0 0
    %997 = vmatpush1.bf16.msra.mxu0 0
    %998 = vmatprep.subr.bf16.mxu0 0
    %999 = vmatpush1.bf16.msra.mxu0 0
    %1000 = vmatprep.subr.bf16.mxu0 0
    %1001 = vmatpush1.bf16.msra.mxu0 0
    %1002 = vmatprep.subr.bf16.mxu0 0
    %1003 = vmatpush1.bf16.msra.mxu0 0
    %1004 = vmatprep.subr.bf16.mxu0 0
    %1005 = vmatpush1.bf16.msra.mxu0 0
    %1006 = vmatprep.subr.bf16.mxu0 0
    %1007 = vmatpush1.bf16.msra.mxu0 0
    %1008 = vmatprep.subr.bf16.mxu0 0
    %1009 = vmatpush1.bf16.msra.mxu0 0
    %1010 = vmatprep.subr.bf16.mxu0 0
    %1011 = vmatpush1.bf16.msra.mxu0 0
    %1012 = vmatprep.subr.bf16.mxu0 0
    %1013 = vmatpush1.bf16.msra.mxu0 0
    %1014 = vmatprep.subr.bf16.mxu0 0
    %1015 = vmatpush1.bf16.msra.mxu0 0
    %1016 = vmatprep.subr.bf16.mxu0 0
    %1017 = vmatpush1.bf16.msra.mxu0 0
    %1018 = vmatprep.mubr.bf16.mxu0 0
    %1019 = vmatmul.mubr.bf16.gmra.mrb[0].mxu0 %v943
    %v1020 = vpop.f32.mrb[0].mxu0
    %v1021 = vadd.f32 0.0, %v1020
    %v1022 = vpop.f32.mrb[0].mxu0
    %v1023 = vpop.f32.mrb[0].mxu0
    %v1024 = vpop.f32.mrb[0].mxu0
    %1025 = vdwg.mxu0
    %v1026 = vadd.f32 %v455, %v1021
    %v1027 = vmul.f32 %v1026, 2.0
    %v1028 = vsel %vm480, %v1027, %v1026
    %v1029 = vxor.u32 %v1028, 2147483648
    %v1030 = vmul.f32 %v1029, 1.442695
    %v1031 = vpow.pop %v1030
    %v1032 = vadd.f32 %v1031, 1.0
    %v1033 = vrcp.pop %v1032
    %v1034 = vmul.f32 1.0, %v1033
    %v1035 = vmul.f32 %v1034, 2.0
    %v1036 = vsub.f32 %v1035, 1.0
    %v1037 = vsel %vm480, %v1036, %v1034
    %v1038 = vmul.f32 %v1037, %v931
    %1040 = vrot.lane.b32.xlu0 %v1037, 64
    %v1041 = vpop.permute.xlu0 %1040
    %v1043 = vmul.f32 %v1037, %v1041
    %1045 = vrot.lane.b32.xlu0 %v1043, 32
    %v1046 = vpop.permute.xlu0 %1045
    %v1048 = vadd.f32 %v1038, %v1046
    %v1049 = vtanh.pop %v1048
    %1051 = vrot.lane.b32.xlu0 %v1049, 64
    %v1052 = vpop.permute.xlu0 %1051
    %v1054 = vmul.f32 %v1037, %v1052
    %v1055 = vpack.c.bf16 %v1054, %v1054
    %1057 = vrot.lane.b32.xlu0 %v1055, 32
    %v1058 = vpop.permute.xlu0 %1057
    %v1060 = vsel %vm321, %v1058, 0
    %1062 = vmatprep.subr.bf16.mxu0 0
    %1063 = vmatpush1.bf16.msra.mxu0 %v587
    %1064 = vmatprep.subr.bf16.mxu0 0
    %1065 = vmatpush1.bf16.msra.mxu0 %v588
    %1066 = vmatprep.subr.bf16.mxu0 0
    %1067 = vmatpush1.bf16.msra.mxu0 0
    %1068 = vmatprep.subr.bf16.mxu0 0
    %1069 = vmatpush1.bf16.msra.mxu0 0
    %1070 = vmatprep.subr.bf16.mxu0 0
    %1071 = vmatpush1.bf16.msra.mxu0 0
    %1072 = vmatprep.subr.bf16.mxu0 0
    %1073 = vmatpush1.bf16.msra.mxu0 0
    %1074 = vmatprep.subr.bf16.mxu0 0
    %1075 = vmatpush1.bf16.msra.mxu0 0
    %1076 = vmatprep.subr.bf16.mxu0 0
    %1077 = vmatpush1.bf16.msra.mxu0 0
    %1078 = vmatprep.subr.bf16.mxu0 0
    %1079 = vmatpush1.bf16.msra.mxu0 0
    %1080 = vmatprep.subr.bf16.mxu0 0
    %1081 = vmatpush1.bf16.msra.mxu0 0
    %1082 = vmatprep.subr.bf16.mxu0 0
    %1083 = vmatpush1.bf16.msra.mxu0 0
    %1084 = vmatprep.subr.bf16.mxu0 0
    %1085 = vmatpush1.bf16.msra.mxu0 0
    %1086 = vmatprep.subr.bf16.mxu0 0
    %1087 = vmatpush1.bf16.msra.mxu0 0
    %1088 = vmatprep.subr.bf16.mxu0 0
    %1089 = vmatpush1.bf16.msra.mxu0 0
    %1090 = vmatprep.subr.bf16.mxu0 0
    %1091 = vmatpush1.bf16.msra.mxu0 0
    %1092 = vmatprep.subr.bf16.mxu0 0
    %1093 = vmatpush1.bf16.msra.mxu0 0
    %1094 = vmatprep.mubr.bf16.mxu0 0
    %1095 = vmatmul.mubr.bf16.gmra.mrb[0].mxu0 %v1060
    %v1096 = vpop.f32.mrb[0].mxu0
    %v1097 = vadd.f32 %v574, %v1096
    %v1098 = vpop.f32.mrb[0].mxu0
    %v1099 = vpop.f32.mrb[0].mxu0
    %v1100 = vpop.f32.mrb[0].mxu0
    %1101 = vdwg.mxu0
    %1102 = vst [vmem:[#allocation2 + $0x20] sm:$0xff] %v1097
    %1103 = vmatprep.subr.bf16.mxu0 0
    %1104 = vmatpush1.bf16.msra.mxu0 %v489
    %1105 = vmatprep.subr.bf16.mxu0 0
    %1106 = vmatpush1.bf16.msra.mxu0 %v490
    %1107 = vmatprep.subr.bf16.mxu0 0
    %1108 = vmatpush1.bf16.msra.mxu0 0
    %1109 = vmatprep.subr.bf16.mxu0 0
    %1110 = vmatpush1.bf16.msra.mxu0 0
    %1111 = vmatprep.subr.bf16.mxu0 0
    %1112 = vmatpush1.bf16.msra.mxu0 0
    %1113 = vmatprep.subr.bf16.mxu0 0
    %1114 = vmatpush1.bf16.msra.mxu0 0
    %1115 = vmatprep.subr.bf16.mxu0 0
    %1116 = vmatpush1.bf16.msra.mxu0 0
    %1117 = vmatprep.subr.bf16.mxu0 0
    %1118 = vmatpush1.bf16.msra.mxu0 0
    %1119 = vmatprep.subr.bf16.mxu0 0
    %1120 = vmatpush1.bf16.msra.mxu0 0
    %1121 = vmatprep.subr.bf16.mxu0 0
    %1122 = vmatpush1.bf16.msra.mxu0 0
    %1123 = vmatprep.subr.bf16.mxu0 0
    %1124 = vmatpush1.bf16.msra.mxu0 0
    %1125 = vmatprep.subr.bf16.mxu0 0
    %1126 = vmatpush1.bf16.msra.mxu0 0
    %1127 = vmatprep.subr.bf16.mxu0 0
    %1128 = vmatpush1.bf16.msra.mxu0 0
    %1129 = vmatprep.subr.bf16.mxu0 0
    %1130 = vmatpush1.bf16.msra.mxu0 0
    %1131 = vmatprep.subr.bf16.mxu0 0
    %1132 = vmatpush1.bf16.msra.mxu0 0
    %1133 = vmatprep.subr.bf16.mxu0 0
    %1134 = vmatpush1.bf16.msra.mxu0 0
    %1135 = vmatprep.mubr.bf16.mxu0 0
    %1136 = vmatmul.mubr.bf16.gmra.mrb[0].mxu0 %v1060
    %v1137 = vpop.f32.mrb[0].mxu0
    %v1138 = vadd.f32 0.0, %v1137
    %v1139 = vpop.f32.mrb[0].mxu0
    %v1140 = vpop.f32.mrb[0].mxu0
    %v1141 = vpop.f32.mrb[0].mxu0
    %1142 = vdwg.mxu0
    %v1143 = vadd.f32 %v458, %v1138
    %v1144 = vmul.f32 %v1143, 2.0
    %v1145 = vsel %vm480, %v1144, %v1143
    %v1146 = vxor.u32 %v1145, 2147483648
    %v1147 = vmul.f32 %v1146, 1.442695
    %v1148 = vpow.pop %v1147
    %v1149 = vadd.f32 %v1148, 1.0
    %v1150 = vrcp.pop %v1149
    %v1151 = vmul.f32 1.0, %v1150
    %v1152 = vmul.f32 %v1151, 2.0
    %v1153 = vsub.f32 %v1152, 1.0
    %v1154 = vsel %vm480, %v1153, %v1151
    %v1155 = vmul.f32 %v1154, %v1048
    %1157 = vrot.lane.b32.xlu0 %v1154, 64
    %v1158 = vpop.permute.xlu0 %1157
    %v1160 = vmul.f32 %v1154, %v1158
    %1162 = vrot.lane.b32.xlu0 %v1160, 32
    %v1163 = vpop.permute.xlu0 %1162
    %v1165 = vadd.f32 %v1155, %v1163
    %v1166 = vtanh.pop %v1165
    %1168 = vrot.lane.b32.xlu0 %v1166, 64
    %v1169 = vpop.permute.xlu0 %1168
    %v1171 = vmul.f32 %v1154, %v1169
    %v1172 = vpack.c.bf16 %v1171, %v1171
    %1174 = vrot.lane.b32.xlu0 %v1172, 32
    %v1175 = vpop.permute.xlu0 %1174
    %v1177 = vsel %vm321, %v1175, 0
    %1179 = vmatprep.subr.bf16.mxu0 0
    %1180 = vmatpush1.bf16.msra.mxu0 %v587
    %1181 = vmatprep.subr.bf16.mxu0 0
    %1182 = vmatpush1.bf16.msra.mxu0 %v588
    %1183 = vmatprep.subr.bf16.mxu0 0
    %1184 = vmatpush1.bf16.msra.mxu0 0
    %1185 = vmatprep.subr.bf16.mxu0 0
    %1186 = vmatpush1.bf16.msra.mxu0 0
    %1187 = vmatprep.subr.bf16.mxu0 0
    %1188 = vmatpush1.bf16.msra.mxu0 0
    %1189 = vmatprep.subr.bf16.mxu0 0
    %1190 = vmatpush1.bf16.msra.mxu0 0
    %1191 = vmatprep.subr.bf16.mxu0 0
    %1192 = vmatpush1.bf16.msra.mxu0 0
    %1193 = vmatprep.subr.bf16.mxu0 0
    %1194 = vmatpush1.bf16.msra.mxu0 0
    %1195 = vmatprep.subr.bf16.mxu0 0
    %1196 = vmatpush1.bf16.msra.mxu0 0
    %1197 = vmatprep.subr.bf16.mxu0 0
    %1198 = vmatpush1.bf16.msra.mxu0 0
    %1199 = vmatprep.subr.bf16.mxu0 0
    %1200 = vmatpush1.bf16.msra.mxu0 0
    %1201 = vmatprep.subr.bf16.mxu0 0
    %1202 = vmatpush1.bf16.msra.mxu0 0
    %1203 = vmatprep.subr.bf16.mxu0 0
    %1204 = vmatpush1.bf16.msra.mxu0 0
    %1205 = vmatprep.subr.bf16.mxu0 0
    %1206 = vmatpush1.bf16.msra.mxu0 0
    %1207 = vmatprep.subr.bf16.mxu0 0
    %1208 = vmatpush1.bf16.msra.mxu0 0
    %1209 = vmatprep.subr.bf16.mxu0 0
    %1210 = vmatpush1.bf16.msra.mxu0 0
    %1211 = vmatprep.mubr.bf16.mxu0 0
    %1212 = vmatmul.mubr.bf16.gmra.mrb[0].mxu0 %v1177
    %v1213 = vpop.f32.mrb[0].mxu0
    %v1214 = vadd.f32 %v574, %v1213
    %v1215 = vpop.f32.mrb[0].mxu0
    %v1216 = vpop.f32.mrb[0].mxu0
    %v1217 = vpop.f32.mrb[0].mxu0
    %1218 = vdwg.mxu0
    %1219 = vst [vmem:[#allocation2 + $0x28] sm:$0xff] %v1214
    %1220 = vmatprep.subr.bf16.mxu0 0
    %1221 = vmatpush1.bf16.msra.mxu0 %v489
    %1222 = vmatprep.subr.bf16.mxu0 0
    %1223 = vmatpush1.bf16.msra.mxu0 %v490
    %1224 = vmatprep.subr.bf16.mxu0 0
    %1225 = vmatpush1.bf16.msra.mxu0 0
    %1226 = vmatprep.subr.bf16.mxu0 0
    %1227 = vmatpush1.bf16.msra.mxu0 0
    %1228 = vmatprep.subr.bf16.mxu0 0
    %1229 = vmatpush1.bf16.msra.mxu0 0
    %1230 = vmatprep.subr.bf16.mxu0 0
    %1231 = vmatpush1.bf16.msra.mxu0 0
    %1232 = vmatprep.subr.bf16.mxu0 0
    %1233 = vmatpush1.bf16.msra.mxu0 0
    %1234 = vmatprep.subr.bf16.mxu0 0
    %1235 = vmatpush1.bf16.msra.mxu0 0
    %1236 = vmatprep.subr.bf16.mxu0 0
    %1237 = vmatpush1.bf16.msra.mxu0 0
    %1238 = vmatprep.subr.bf16.mxu0 0
    %1239 = vmatpush1.bf16.msra.mxu0 0
    %1240 = vmatprep.subr.bf16.mxu0 0
    %1241 = vmatpush1.bf16.msra.mxu0 0
    %1242 = vmatprep.subr.bf16.mxu0 0
    %1243 = vmatpush1.bf16.msra.mxu0 0
    %1244 = vmatprep.subr.bf16.mxu0 0
    %1245 = vmatpush1.bf16.msra.mxu0 0
    %1246 = vmatprep.subr.bf16.mxu0 0
    %1247 = vmatpush1.bf16.msra.mxu0 0
    %1248 = vmatprep.subr.bf16.mxu0 0
    %1249 = vmatpush1.bf16.msra.mxu0 0
    %1250 = vmatprep.subr.bf16.mxu0 0
    %1251 = vmatpush1.bf16.msra.mxu0 0
    %1252 = vmatprep.mubr.bf16.mxu0 0
    %1253 = vmatmul.mubr.bf16.gmra.mrb[0].mxu0 %v1177
    %v1254 = vpop.f32.mrb[0].mxu0
    %v1255 = vadd.f32 0.0, %v1254
    %v1256 = vpop.f32.mrb[0].mxu0
    %v1257 = vpop.f32.mrb[0].mxu0
    %v1258 = vpop.f32.mrb[0].mxu0
    %1259 = vdwg.mxu0
    %v1260 = vadd.f32 %v463, %v1255
    %v1261 = vmul.f32 %v1260, 2.0
    %v1262 = vsel %vm480, %v1261, %v1260
    %v1263 = vxor.u32 %v1262, 2147483648
    %v1264 = vmul.f32 %v1263, 1.442695
    %v1265 = vpow.pop %v1264
    %v1266 = vadd.f32 %v1265, 1.0
    %v1267 = vrcp.pop %v1266
    %v1268 = vmul.f32 1.0, %v1267
    %v1269 = vmul.f32 %v1268, 2.0
    %v1270 = vsub.f32 %v1269, 1.0
    %v1271 = vsel %vm480, %v1270, %v1268
    %v1272 = vmul.f32 %v1271, %v1165
    %1274 = vrot.lane.b32.xlu0 %v1271, 64
    %v1275 = vpop.permute.xlu0 %1274
    %v1277 = vmul.f32 %v1271, %v1275
    %1279 = vrot.lane.b32.xlu0 %v1277, 32
    %v1280 = vpop.permute.xlu0 %1279
    %v1282 = vadd.f32 %v1272, %v1280
    %v1283 = vtanh.pop %v1282
    %1285 = vrot.lane.b32.xlu0 %v1283, 64
    %v1286 = vpop.permute.xlu0 %1285
    %v1288 = vmul.f32 %v1271, %v1286
    %v1289 = vpack.c.bf16 %v1288, %v1288
    %1291 = vrot.lane.b32.xlu0 %v1289, 32
    %v1292 = vpop.permute.xlu0 %1291
    %v1294 = vsel %vm321, %v1292, 0
    %1296 = vmatprep.subr.bf16.mxu0 0
    %1297 = vmatpush1.bf16.msra.mxu0 %v587
    %1298 = vmatprep.subr.bf16.mxu0 0
    %1299 = vmatpush1.bf16.msra.mxu0 %v588
    %1300 = vmatprep.subr.bf16.mxu0 0
    %1301 = vmatpush1.bf16.msra.mxu0 0
    %1302 = vmatprep.subr.bf16.mxu0 0
    %1303 = vmatpush1.bf16.msra.mxu0 0
    %1304 = vmatprep.subr.bf16.mxu0 0
    %1305 = vmatpush1.bf16.msra.mxu0 0
    %1306 = vmatprep.subr.bf16.mxu0 0
    %1307 = vmatpush1.bf16.msra.mxu0 0
    %1308 = vmatprep.subr.bf16.mxu0 0
    %1309 = vmatpush1.bf16.msra.mxu0 0
    %1310 = vmatprep.subr.bf16.mxu0 0
    %1311 = vmatpush1.bf16.msra.mxu0 0
    %1312 = vmatprep.subr.bf16.mxu0 0
    %1313 = vmatpush1.bf16.msra.mxu0 0
    %1314 = vmatprep.subr.bf16.mxu0 0
    %1315 = vmatpush1.bf16.msra.mxu0 0
    %1316 = vmatprep.subr.bf16.mxu0 0
    %1317 = vmatpush1.bf16.msra.mxu0 0
    %1318 = vmatprep.subr.bf16.mxu0 0
    %1319 = vmatpush1.bf16.msra.mxu0 0
    %1320 = vmatprep.subr.bf16.mxu0 0
    %1321 = vmatpush1.bf16.msra.mxu0 0
    %1322 = vmatprep.subr.bf16.mxu0 0
    %1323 = vmatpush1.bf16.msra.mxu0 0
    %1324 = vmatprep.subr.bf16.mxu0 0
    %1325 = vmatpush1.bf16.msra.mxu0 0
    %1326 = vmatprep.subr.bf16.mxu0 0
    %1327 = vmatpush1.bf16.msra.mxu0 0
    %1328 = vmatprep.mubr.bf16.mxu0 0
    %1329 = vmatmul.mubr.bf16.gmra.mrb[0].mxu0 %v1294
    %v1330 = vpop.f32.mrb[0].mxu0
    %v1331 = vadd.f32 %v574, %v1330
    %v1332 = vpop.f32.mrb[0].mxu0
    %v1333 = vpop.f32.mrb[0].mxu0
    %v1334 = vpop.f32.mrb[0].mxu0
    %1335 = vdwg.mxu0
    %1336 = vst [vmem:[#allocation2 + $0x30] sm:$0xff] %v1331
    %1337 = vmatprep.subr.bf16.mxu0 0
    %1338 = vmatpush1.bf16.msra.mxu0 %v489
    %1339 = vmatprep.subr.bf16.mxu0 0
    %1340 = vmatpush1.bf16.msra.mxu0 %v490
    %1341 = vmatprep.subr.bf16.mxu0 0
    %1342 = vmatpush1.bf16.msra.mxu0 0
    %1343 = vmatprep.subr.bf16.mxu0 0
    %1344 = vmatpush1.bf16.msra.mxu0 0
    %1345 = vmatprep.subr.bf16.mxu0 0
    %1346 = vmatpush1.bf16.msra.mxu0 0
    %1347 = vmatprep.subr.bf16.mxu0 0
    %1348 = vmatpush1.bf16.msra.mxu0 0
    %1349 = vmatprep.subr.bf16.mxu0 0
    %1350 = vmatpush1.bf16.msra.mxu0 0
    %1351 = vmatprep.subr.bf16.mxu0 0
    %1352 = vmatpush1.bf16.msra.mxu0 0
    %1353 = vmatprep.subr.bf16.mxu0 0
    %1354 = vmatpush1.bf16.msra.mxu0 0
    %1355 = vmatprep.subr.bf16.mxu0 0
    %1356 = vmatpush1.bf16.msra.mxu0 0
    %1357 = vmatprep.subr.bf16.mxu0 0
    %1358 = vmatpush1.bf16.msra.mxu0 0
    %1359 = vmatprep.subr.bf16.mxu0 0
    %1360 = vmatpush1.bf16.msra.mxu0 0
    %1361 = vmatprep.subr.bf16.mxu0 0
    %1362 = vmatpush1.bf16.msra.mxu0 0
    %1363 = vmatprep.subr.bf16.mxu0 0
    %1364 = vmatpush1.bf16.msra.mxu0 0
    %1365 = vmatprep.subr.bf16.mxu0 0
    %1366 = vmatpush1.bf16.msra.mxu0 0
    %1367 = vmatprep.subr.bf16.mxu0 0
    %1368 = vmatpush1.bf16.msra.mxu0 0
    %1369 = vmatprep.mubr.bf16.mxu0 0
    %1370 = vmatmul.mubr.bf16.gmra.mrb[0].mxu0 %v1294
    %v1371 = vpop.f32.mrb[0].mxu0
    %v1372 = vadd.f32 0.0, %v1371
    %v1373 = vpop.f32.mrb[0].mxu0
    %v1374 = vpop.f32.mrb[0].mxu0
    %v1375 = vpop.f32.mrb[0].mxu0
    %1376 = vdwg.mxu0
    %v1377 = vadd.f32 %v466, %v1372
    %v1378 = vmul.f32 %v1377, 2.0
    %v1379 = vsel %vm480, %v1378, %v1377
    %v1380 = vxor.u32 %v1379, 2147483648
    %v1381 = vmul.f32 %v1380, 1.442695
    %v1382 = vpow.pop %v1381
    %v1383 = vadd.f32 %v1382, 1.0
    %v1384 = vrcp.pop %v1383
    %v1385 = vmul.f32 1.0, %v1384
    %v1386 = vmul.f32 %v1385, 2.0
    %v1387 = vsub.f32 %v1386, 1.0
    %v1388 = vsel %vm480, %v1387, %v1385
    %v1389 = vmul.f32 %v1388, %v1282
    %1391 = vrot.lane.b32.xlu0 %v1388, 64
    %v1392 = vpop.permute.xlu0 %1391
    %v1394 = vmul.f32 %v1388, %v1392
    %1396 = vrot.lane.b32.xlu0 %v1394, 32
    %v1397 = vpop.permute.xlu0 %1396
    %v1399 = vadd.f32 %v1389, %v1397
    %v1400 = vtanh.pop %v1399
    %1402 = vrot.lane.b32.xlu0 %v1400, 64
    %v1403 = vpop.permute.xlu0 %1402
    %v1405 = vmul.f32 %v1388, %v1403
    %v1406 = vpack.c.bf16 %v1405, %v1405
    %1408 = vrot.lane.b32.xlu0 %v1406, 32
    %v1409 = vpop.permute.xlu0 %1408
    %v1411 = vsel %vm321, %v1409, 0
    %1413 = vmatprep.subr.bf16.mxu0 0
    %1414 = vmatpush1.bf16.msra.mxu0 %v587
    %1415 = vmatprep.subr.bf16.mxu0 0
    %1416 = vmatpush1.bf16.msra.mxu0 %v588
    %1417 = vmatprep.subr.bf16.mxu0 0
    %1418 = vmatpush1.bf16.msra.mxu0 0
    %1419 = vmatprep.subr.bf16.mxu0 0
    %1420 = vmatpush1.bf16.msra.mxu0 0
    %1421 = vmatprep.subr.bf16.mxu0 0
    %1422 = vmatpush1.bf16.msra.mxu0 0
    %1423 = vmatprep.subr.bf16.mxu0 0
    %1424 = vmatpush1.bf16.msra.mxu0 0
    %1425 = vmatprep.subr.bf16.mxu0 0
    %1426 = vmatpush1.bf16.msra.mxu0 0
    %1427 = vmatprep.subr.bf16.mxu0 0
    %1428 = vmatpush1.bf16.msra.mxu0 0
    %1429 = vmatprep.subr.bf16.mxu0 0
    %1430 = vmatpush1.bf16.msra.mxu0 0
    %1431 = vmatprep.subr.bf16.mxu0 0
    %1432 = vmatpush1.bf16.msra.mxu0 0
    %1433 = vmatprep.subr.bf16.mxu0 0
    %1434 = vmatpush1.bf16.msra.mxu0 0
    %1435 = vmatprep.subr.bf16.mxu0 0
    %1436 = vmatpush1.bf16.msra.mxu0 0
    %1437 = vmatprep.subr.bf16.mxu0 0
    %1438 = vmatpush1.bf16.msra.mxu0 0
    %1439 = vmatprep.subr.bf16.mxu0 0
    %1440 = vmatpush1.bf16.msra.mxu0 0
    %1441 = vmatprep.subr.bf16.mxu0 0
    %1442 = vmatpush1.bf16.msra.mxu0 0
    %1443 = vmatprep.subr.bf16.mxu0 0
    %1444 = vmatpush1.bf16.msra.mxu0 0
    %1445 = vmatprep.mubr.bf16.mxu0 0
    %1446 = vmatmul.mubr.bf16.gmra.mrb[0].mxu0 %v1411
    %v1447 = vpop.f32.mrb[0].mxu0
    %v1448 = vadd.f32 %v574, %v1447
    %v1449 = vpop.f32.mrb[0].mxu0
    %v1450 = vpop.f32.mrb[0].mxu0
    %v1451 = vpop.f32.mrb[0].mxu0
    %1452 = vdwg.mxu0
    %1453 = vst [vmem:[#allocation2 + $0x38] sm:$0xff] %v1448
    %1455 = vrot.lane.b32.xlu0 %v1405, 32
    %v1456 = vpop.permute.xlu0 %1455
    %1458 = vst.msk [vmem:[#allocation4] sm:$0xff] %vm321, %v1456
    %1460 = vrot.lane.b32.xlu0 %v1399, 96
    %v1461 = vpop.permute.xlu0 %1460
    %1463 = vst.msk [vmem:[#allocation6] sm:$0xff] %vm321, %v1461
    // Predicated region
    $region42: #{tpu_custom_call.1} parent=1 // pred_check
      _
    $region43: #{tpu_custom_call.1} parent=1 // pred_check_branch
      %1465 = sbr.rel (0) target = $region45
    $region44: #{tpu_custom_call.1} parent=1 // pred_region
      %s1467 = ssub.s32 1024, 1024
      %1468 = vsyncadd [#allocation3], %s1467
      %s1469 = sshll.u32 [#allocation2], 4
      %s1470 = int_to_ptr.vmem [resolvable:$true] %s1469
      %1475 = dma.vmem_to_hbm [thread:$0]  %s1470, 1024, %s10, [#allocation3], 128, 128, 8
    $region45: #{tpu_custom_call.1} parent=1 // pred_fallthru
      _
    // Predicated region
    $region46: #{tpu_custom_call.1} parent=1 // pred_check
      _
    $region47: #{tpu_custom_call.1} parent=1 // pred_check_branch
      %1477 = sbr.rel (0) target = $region49
    $region48: #{tpu_custom_call.1} parent=1 // pred_region
      %s1479 = ssub.s32 128, 128
      %1480 = vsyncadd [#allocation5], %s1479
      %s1482 = sshll.u32 [#allocation4], 4
      %s1483 = int_to_ptr.vmem [resolvable:$true] %s1482
      %1485 = dma.vmem_to_hbm [thread:$0]  %s1483, 128, %s11, [#allocation5]
    $region49: #{tpu_custom_call.1} parent=1 // pred_fallthru
      _
    // Predicated region
    $region50: #{tpu_custom_call.1} parent=1 // pred_check
      _
    $region51: #{tpu_custom_call.1} parent=1 // pred_check_branch
      %1487 = sbr.rel (0) target = $region53
    $region52: #{tpu_custom_call.1} parent=1 // pred_region
      %s1489 = ssub.s32 128, 128
      %1490 = vsyncadd [#allocation5], %s1489
      %s1492 = sshll.u32 [#allocation6], 4
      %s1493 = int_to_ptr.vmem [resolvable:$true] %s1492
      %1495 = dma.vmem_to_hbm [thread:$0]  %s1493, 128, %s12, [#allocation5]
    $region53: #{tpu_custom_call.1} parent=1 // pred_fallthru
      _
    // Predicated region
    $region54: #{tpu_custom_call.1} parent=1 // pred_check
      _
    $region55: #{tpu_custom_call.1} parent=1 // pred_check_branch
      %1497 = sbr.rel (0) target = $region57
    $region56: #{tpu_custom_call.1} parent=1 // pred_region
      %1498 = dma.done [#allocation3], 1024
    $region57: #{tpu_custom_call.1} parent=1 // pred_fallthru
      _
    // Predicated region
    $region58: #{tpu_custom_call.1} parent=1 // pred_check
      _
    $region59: #{tpu_custom_call.1} parent=1 // pred_check_branch
      %1500 = sbr.rel (0) target = $region61
    $region60: #{tpu_custom_call.1} parent=1 // pred_region
      %1501 = dma.done [#allocation5], 128
    $region61: #{tpu_custom_call.1} parent=1 // pred_fallthru
      _
    // Predicated region
    $region62: #{tpu_custom_call.1} parent=1 // pred_check
      _
    $region63: #{tpu_custom_call.1} parent=1 // pred_check_branch
      %1503 = sbr.rel (0) target = $region65
    $region64: #{tpu_custom_call.1} parent=1 // pred_region
      %1504 = dma.done [#allocation5], 128
    $region65: #{tpu_custom_call.1} parent=1 // pred_fallthru
      _
    %1505 = vsyncpa [#allocation3], 1
    %1506 = vsyncpa [#allocation5], 1

</llo_original>
